<compile_context>
chip_gen: v7x
topology: tpu7x:2x2x1
jax: 0.10.0
libtpu: 0.0.40
codegen_flags: <defaults>
</compile_context>

<pallas_src>
import functools

import jax
import jax.numpy as jnp
from jax.experimental import pallas as pl
from jax.experimental.pallas import tpu as pltpu


def _round_up(n, m):
    return ((n + m - 1) // m) * m


def _fused_lstm_cell(gates, c_prev, HH):
    """Fused bi-directional LSTM cell.

    gates: (B, 4*HH) with layout [i, f, g, o]; each gate block is [fwd | bwd].
    state: (B, HH) with layout [fwd | bwd], HH = 2 * per-direction hidden.
    """
    sig = jax.nn.sigmoid(gates)                 # one EUP pass over the full slab
    i = sig[:, 0:HH]
    f = sig[:, HH:2 * HH]
    o = sig[:, 3 * HH:4 * HH]
    g = jnp.tanh(gates[:, 2 * HH:3 * HH])
    c_new = f * c_prev + i * g
    h_new = o * jnp.tanh(c_new)
    return h_new, c_new


def autoencoder_kernel(
    # inputs
    ids_ref,      # (T*Bp, 2) int32: row t*Bp+b = [x[b,t], x[b,T-1-t]]
    tbl_ref,      # (2*Vt, 8He): rows [0,Vt) = emb@Wih1_fwd + b1, [Vt,2Vt) = emb@Wih1_bwd
    whh1_ref,     # (2He, 8He) block-diagonal encoder recurrent weights
    wfc1_ref,     # (2He, Bop) fc1 (columns zero-padded to Bop)
    wfc2_ref,     # (Bop, Hd)  fc2 (rows zero-padded)
    wih2_ref,     # (Hd, 8Hd)  fused decoder input projection
    whh2_ref,     # (2Hd, 8Hd) block-diagonal decoder recurrent weights
    wfc3_ref,     # (2Hd, Vp)  fc3 (columns zero-padded to Vp)
    bias_ref,     # (8, Wp) bias pack: row0=bfc1(Bop) row1=bfc2(Hd) row2=b2(8Hd) row3=bfc3(Vp)
    # outputs
    lv_ref,       # (Bp, Bop)
    logits_ref,   # (T*Bp, Vp)
):
    Bp = lv_ref.shape[0]
    Bop = lv_ref.shape[1]
    T = logits_ref.shape[0] // Bp
    Vp = logits_ref.shape[1]
    He2 = whh1_ref.shape[0]            # 2 * encoder hidden (fused state width)
    Hd2 = whh2_ref.shape[0]            # 2 * decoder hidden
    Hd = Hd2 // 2
    Vt = tbl_ref.shape[0] // 2
    R = logits_ref.shape[0]            # T * Bp

    # -------- encoder: fused embedding gather + input projection (one dot) ----
    ids = ids_ref[...]                                    # (R, 2) int32
    iota = jax.lax.broadcasted_iota(jnp.int32, (R, 2 * Vt), 1)
    target = jnp.where(iota < Vt, ids[:, 0:1], ids[:, 1:2] + Vt)
    onehot = (iota == target).astype(jnp.float32)         # two ones per row
    # b1 is folded into the forward-half table rows.
    xg_all = jnp.dot(onehot, tbl_ref[...], preferred_element_type=jnp.float32)

    # -------- encoder: fused bidirectional LSTM recurrence ----
    whh1 = whh1_ref[...]
    h = jnp.zeros((Bp, He2), jnp.float32)
    c = jnp.zeros((Bp, He2), jnp.float32)
    for t in range(T):                 # fully unrolled; h/c stay in vregs
        gates = xg_all[t * Bp:(t + 1) * Bp, :] + jnp.dot(
            h, whh1, preferred_element_type=jnp.float32)
        h, c = _fused_lstm_cell(gates, c, He2)

    # Fused final state layout [fwd_final | bwd_final] ==
    # torch.cat((hidden_states[-2], hidden_states[-1]), dim=1).
    lv = (jnp.dot(h, wfc1_ref[...], preferred_element_type=jnp.float32)
          + bias_ref[0:1, 0:Bop])
    lv_ref[...] = lv                   # dropout(p=0) is the identity; lane-dense store

    # -------- decoder ----
    d = (jnp.dot(lv, wfc2_ref[...], preferred_element_type=jnp.float32)
         + bias_ref[1:2, 0:Hd])
    # Decoder input is fc2(lv).repeat(T,...): time-invariant -> project once.
    xg_dec = (jnp.dot(d, wih2_ref[...], preferred_element_type=jnp.float32)
              + bias_ref[2:3, 0:4 * Hd2])

    whh2 = whh2_ref[...]
    h = jnp.zeros((Bp, Hd2), jnp.float32)
    c = jnp.zeros((Bp, Hd2), jnp.float32)
    hs = []
    for s in range(T):
        gates = xg_dec + jnp.dot(h, whh2, preferred_element_type=jnp.float32)
        h, c = _fused_lstm_cell(gates, c, Hd2)
        hs.append(h)

    # output[t] = [h_fwd(step t) | h_bwd(step T-1-t)] ; single fused fc3 dot.
    g_rows = [jnp.concatenate([hs[t][:, 0:Hd], hs[T - 1 - t][:, Hd:Hd2]], axis=1)
              for t in range(T)]
    g_all = jnp.concatenate(g_rows, axis=0)               # (T*Bp, 2Hd)
    logits_ref[...] = (
        jnp.dot(g_all, wfc3_ref[...], preferred_element_type=jnp.float32)
        + bias_ref[3:4, 0:Vp])


# ----------------------------- wrapper glue --------------------------------

def _interleave_gate_cols(a_f, a_b, H):
    """(R,4H),(R,4H) per-direction gate columns -> fused (R,8H) layout
    [i_f|i_b, f_f|f_b, g_f|g_b, o_f|o_b]."""
    blocks = []
    for k in range(4):
        blocks.append(a_f[:, k * H:(k + 1) * H])
        blocks.append(a_b[:, k * H:(k + 1) * H])
    return jnp.concatenate(blocks, axis=1)


def _fuse_bilstm(wih_f, whh_f, b_f, wih_b, whh_b, b_b, *, shared_input):
    """Build fused bi-LSTM parameters from PyTorch-shaped ones.

    wih_* (4H, In), whh_* (4H, H), b_* (4H,) (already b_ih + b_hh).
    Returns wih (In or 2*In, 8H), whh (2H, 8H) block-diagonal, b (1, 8H).
    """
    H = whh_f.shape[1]
    wih_fT, wih_bT = wih_f.T, wih_b.T            # (In, 4H)
    whh_fT, whh_bT = whh_f.T, whh_b.T            # (H, 4H)
    zih = jnp.zeros_like(wih_fT)
    zhh = jnp.zeros_like(whh_fT)
    if shared_input:
        wih = _interleave_gate_cols(wih_fT, wih_bT, H)                 # (In, 8H)
    else:
        wih = jnp.concatenate(                                         # (2In, 8H)
            [_interleave_gate_cols(wih_fT, zih, H),
             _interleave_gate_cols(zih, wih_bT, H)], axis=0)
    whh = jnp.concatenate(                                             # (2H, 8H)
        [_interleave_gate_cols(whh_fT, zhh, H),
         _interleave_gate_cols(zhh, whh_bT, H)], axis=0)
    b = _interleave_gate_cols(b_f.reshape(1, -1), b_b.reshape(1, -1), H)  # (1,8H)
    return wih, whh, b


def _pad_to(a, shape):
    return jnp.pad(a, [(0, s - d) for d, s in zip(a.shape, shape)])


def init_params(key, V, E, He, Bo, Hd):
    ks = jax.random.split(key, 23)

    def norm(k, shape, scale=0.1):
        return scale * jax.random.normal(k, shape, dtype=jnp.float32)

    p = {}
    p["emb"] = norm(ks[0], (V, E))
    # encoder bidirectional LSTM (PyTorch parameter shapes)
    p["wih1f"] = norm(ks[1], (4 * He, E));  p["whh1f"] = norm(ks[2], (4 * He, He))
    p["b1f"] = norm(ks[3], (4 * He,)) + norm(ks[4], (4 * He,))     # b_ih + b_hh
    p["wih1b"] = norm(ks[5], (4 * He, E));  p["whh1b"] = norm(ks[6], (4 * He, He))
    p["b1b"] = norm(ks[7], (4 * He,)) + norm(ks[8], (4 * He,))
    # fc1, fc2
    p["wfc1"] = norm(ks[9], (Bo, 2 * He));  p["bfc1"] = norm(ks[10], (Bo,))
    p["wfc2"] = norm(ks[11], (Hd, Bo));     p["bfc2"] = norm(ks[12], (Hd,))
    # decoder bidirectional LSTM
    p["wih2f"] = norm(ks[13], (4 * Hd, Hd)); p["whh2f"] = norm(ks[14], (4 * Hd, Hd))
    p["b2f"] = norm(ks[15], (4 * Hd,)) + norm(ks[16], (4 * Hd,))
    p["wih2b"] = norm(ks[17], (4 * Hd, Hd)); p["whh2b"] = norm(ks[18], (4 * Hd, Hd))
    p["b2b"] = norm(ks[19], (4 * Hd,)) + norm(ks[20], (4 * Hd,))
    # fc3
    p["wfc3"] = norm(ks[21], (V, 2 * Hd));  p["bfc3"] = norm(ks[22], (V,))
    return p


def autoencoder_forward(params, x):
    V, E = params["emb"].shape
    He = params["whh1f"].shape[1]
    Bo = params["wfc1"].shape[0]
    Hd = params["whh2f"].shape[1]
    B, T = x.shape

    # Padded sizes (sublane-aligned batch, lane-dense outputs).
    Bp = max(8, _round_up(B, 8))
    Bop = _round_up(Bo, 128)
    Vp = _round_up(V, 128)
    Vt = _round_up(V, 8)

    # ---- parameter prep (constant under jit: params are closed over) ----
    wih1, whh1, b1 = _fuse_bilstm(
        params["wih1f"], params["whh1f"], params["b1f"],
        params["wih1b"], params["whh1b"], params["b1b"], shared_input=False)
    wih2, whh2, b2 = _fuse_bilstm(
        params["wih2f"], params["whh2f"], params["b2f"],
        params["wih2b"], params["whh2b"], params["b2b"], shared_input=True)

    # Embedding folded into the encoder input projection; b1 folded into the
    # forward-half rows (each one-hot row has exactly one 1 per half).
    Af = params["emb"] @ wih1[:E, :] + b1          # (V, 8He)
    Ab = params["emb"] @ wih1[E:, :]               # (V, 8He)
    tbl = jnp.concatenate(
        [_pad_to(Af, (Vt, 8 * He)), _pad_to(Ab, (Vt, 8 * He))], axis=0)

    wfc1_pad = _pad_to(params["wfc1"].T, (2 * He, Bop))
    wfc2_pad = _pad_to(params["wfc2"].T, (Bop, Hd))
    wfc3_pad = _pad_to(params["wfc3"].T, (2 * Hd, Vp))

    Wp = _round_up(max(Bop, Hd, 8 * Hd, Vp), 128)
    bias_pack = jnp.zeros((8, Wp), jnp.float32)
    bias_pack = bias_pack.at[0, :Bo].set(params["bfc1"])
    bias_pack = bias_pack.at[1, :Hd].set(params["bfc2"])
    bias_pack = bias_pack.at[2, :8 * Hd].set(b2[0])
    bias_pack = bias_pack.at[3, :V].set(params["bfc3"])

    # ---- per-call glue: just the int32 index layout (tiny) ----
    xt = jnp.pad(x.T.astype(jnp.int32), ((0, 0), (0, Bp - B)))       # (T, Bp)
    ids = jnp.stack([xt, xt[::-1]], axis=-1).reshape(T * Bp, 2)      # (T*Bp, 2)

    inputs = (ids, tbl, whh1, wfc1_pad, wfc2_pad, wih2, whh2, wfc3_pad, bias_pack)

    out_shape = (
        jax.ShapeDtypeStruct((Bp, Bop), jnp.float32),
        jax.ShapeDtypeStruct((T * Bp, Vp), jnp.float32),
    )

    lv_pad, logits_pad = pl.pallas_call(
        autoencoder_kernel,
        out_shape=out_shape,
        in_specs=[pl.BlockSpec(memory_space=pltpu.MemorySpace.VMEM)] * len(inputs),
        out_specs=(pl.BlockSpec(memory_space=pltpu.MemorySpace.VMEM),
                   pl.BlockSpec(memory_space=pltpu.MemorySpace.VMEM)),
    )(*inputs)

    lv = lv_pad[:B, :Bo]
    # (T*Bp, Vp) -> (T, B, V) -> (B, V, T), matching PyTorch logits.transpose(1, 2)
    logits = jnp.transpose(logits_pad.reshape(T, Bp, Vp)[:, :B, :V], (1, 2, 0))
    # jnp.squeeze mirrors torch's lv.squeeze() (drops any size-1 dims).
    return jnp.squeeze(lv), logits


if __name__ == "__main__":
    NUC_PAIR_SIZE = 4
    EMB_DIMS = 8
    E_HIDDEN = 16
    BOTTLENECK = 8
    D_HIDDEN = 16
    SEQ_LEN = 8
    BATCH = 2
    V = NUC_PAIR_SIZE + 1            # module does nuc_pair_size += 1

    key = jax.random.PRNGKey(0)
    k_param, k_x = jax.random.split(key)
    params = init_params(k_param, V, EMB_DIMS, E_HIDDEN, BOTTLENECK, D_HIDDEN)
    x = jax.random.randint(k_x, (BATCH, SEQ_LEN), 0, V, dtype=jnp.int32)

    fwd = jax.jit(functools.partial(autoencoder_forward, params))
    lv, logits = fwd(x)
    jax.block_until_ready((lv, logits))

    assert lv.shape == (BATCH, BOTTLENECK), lv.shape
    assert logits.shape == (BATCH, V, SEQ_LEN), logits.shape
    assert bool(jnp.all(jnp.isfinite(lv))) and bool(jnp.all(jnp.isfinite(logits)))
    print("KERNEL_OK")
</pallas_src>

<mosaic_0001>
module attributes {stable_mosaic.version = 11 : i64} {
  func.func @autoencoder_kernel(%arg0: memref<64x2xi32, #tpu.memory_space<vmem>>, %arg1: memref<16x128xf32, #tpu.memory_space<vmem>>, %arg2: memref<32x128xf32, #tpu.memory_space<vmem>>, %arg3: memref<32x128xf32, #tpu.memory_space<vmem>>, %arg4: memref<128x16xf32, #tpu.memory_space<vmem>>, %arg5: memref<16x128xf32, #tpu.memory_space<vmem>>, %arg6: memref<32x128xf32, #tpu.memory_space<vmem>>, %arg7: memref<32x128xf32, #tpu.memory_space<vmem>>, %arg8: memref<8x128xf32, #tpu.memory_space<vmem>>, %arg9: memref<8x128xf32, #tpu.memory_space<vmem>>, %arg10: memref<64x128xf32, #tpu.memory_space<vmem>>) attributes {dimension_semantics = [], scalar_prefetch = 0 : i64, scratch_operands = 0 : i64, tpu.core_type = #tpu.core_type<tc>} {
    %c0 = arith.constant 0 : index
    %c0_0 = arith.constant 0 : index
    %0 = vector.load %arg0[%c0, %c0_0] : memref<64x2xi32, #tpu.memory_space<vmem>>, vector<64x2xi32>
    %1 = tpu.iota {dimensions = array<i32: 1>} : vector<64x16xi32>
    %c8_i32 = arith.constant 8 : i32
    %2 = vector.broadcast %c8_i32 : i32 to vector<64x16xi32>
    %3 = arith.cmpi slt, %1, %2 : vector<64x16xi32>
    %4 = vector.extract_strided_slice %0 {offsets = [0, 0], sizes = [64, 1], strides = [1, 1]} : vector<64x2xi32> to vector<64x1xi32>
    %5 = vector.extract_strided_slice %0 {offsets = [0, 1], sizes = [64, 1], strides = [1, 1]} : vector<64x2xi32> to vector<64x1xi32>
    %c8_i32_1 = arith.constant 8 : i32
    %6 = vector.broadcast %c8_i32_1 : i32 to vector<64x1xi32>
    %7 = arith.addi %5, %6 : vector<64x1xi32>
    %8 = vector.shape_cast %4 : vector<64x1xi32> to vector<64x1xi32>
    %9 = vector.broadcast %8 : vector<64x1xi32> to vector<64x16xi32>
    %10 = vector.shape_cast %7 : vector<64x1xi32> to vector<64x1xi32>
    %11 = vector.broadcast %10 : vector<64x1xi32> to vector<64x16xi32>
    %12 = arith.select %3, %9, %11 : vector<64x16xi1>, vector<64x16xi32>
    %13 = arith.cmpi eq, %1, %12 : vector<64x16xi32>
    %14 = arith.extui %13 : vector<64x16xi1> to vector<64x16xi32>
    %15 = arith.sitofp %14 : vector<64x16xi32> to vector<64x16xf32>
    %c0_2 = arith.constant 0 : index
    %c0_3 = arith.constant 0 : index
    %16 = vector.load %arg1[%c0_2, %c0_3] : memref<16x128xf32, #tpu.memory_space<vmem>>, vector<16x128xf32>
    %cst = arith.constant dense<0.000000e+00> : vector<64x128xf32>
    %17 = tpu.matmul %15, %16, %cst {dimension_numbers = #tpu.dot_dimension_numbers<[1], [0], [0], [1], [0, 0, 1, 1], [], []>} : vector<64x16xf32>, vector<16x128xf32>, vector<64x128xf32> -> vector<64x128xf32>
    %c0_4 = arith.constant 0 : index
    %c0_5 = arith.constant 0 : index
    %18 = vector.load %arg2[%c0_4, %c0_5] : memref<32x128xf32, #tpu.memory_space<vmem>>, vector<32x128xf32>
    %cst_6 = arith.constant 0.000000e+00 : f32
    %19 = vector.broadcast %cst_6 : f32 to vector<8x32xf32>
    %cst_7 = arith.constant 0.000000e+00 : f32
    %20 = vector.broadcast %cst_7 : f32 to vector<8x32xf32>
    %21 = vector.extract_strided_slice %17 {offsets = [0, 0], sizes = [8, 128], strides = [1, 1]} : vector<64x128xf32> to vector<8x128xf32>
    %cst_8 = arith.constant dense<0.000000e+00> : vector<8x128xf32>
    %22 = tpu.matmul %19, %18, %cst_8 {dimension_numbers = #tpu.dot_dimension_numbers<[1], [0], [0], [1], [0, 0, 1, 1], [], []>} : vector<8x32xf32>, vector<32x128xf32>, vector<8x128xf32> -> vector<8x128xf32>
    %23 = arith.addf %21, %22 : vector<8x128xf32>
    %24 = arith.negf %23 : vector<8x128xf32>
    %25 = math.exp %24 : vector<8x128xf32>
    %cst_9 = arith.constant 1.000000e+00 : f32
    %26 = vector.broadcast %cst_9 : f32 to vector<8x128xf32>
    %27 = arith.addf %26, %25 : vector<8x128xf32>
    %28 = arith.divf %26, %27 : vector<8x128xf32>
    %29 = vector.extract_strided_slice %28 {offsets = [0, 0], sizes = [8, 32], strides = [1, 1]} : vector<8x128xf32> to vector<8x32xf32>
    %30 = vector.extract_strided_slice %28 {offsets = [0, 32], sizes = [8, 32], strides = [1, 1]} : vector<8x128xf32> to vector<8x32xf32>
    %31 = vector.extract_strided_slice %28 {offsets = [0, 96], sizes = [8, 32], strides = [1, 1]} : vector<8x128xf32> to vector<8x32xf32>
    %32 = vector.extract_strided_slice %23 {offsets = [0, 64], sizes = [8, 32], strides = [1, 1]} : vector<8x128xf32> to vector<8x32xf32>
    %33 = math.tanh %32 : vector<8x32xf32>
    %34 = arith.mulf %30, %20 : vector<8x32xf32>
    %35 = arith.mulf %29, %33 : vector<8x32xf32>
    %36 = arith.addf %34, %35 : vector<8x32xf32>
    %37 = math.tanh %36 : vector<8x32xf32>
    %38 = arith.mulf %31, %37 : vector<8x32xf32>
    %39 = vector.extract_strided_slice %17 {offsets = [8, 0], sizes = [8, 128], strides = [1, 1]} : vector<64x128xf32> to vector<8x128xf32>
    %cst_10 = arith.constant dense<0.000000e+00> : vector<8x128xf32>
    %40 = tpu.matmul %38, %18, %cst_10 {dimension_numbers = #tpu.dot_dimension_numbers<[1], [0], [0], [1], [0, 0, 1, 1], [], []>} : vector<8x32xf32>, vector<32x128xf32>, vector<8x128xf32> -> vector<8x128xf32>
    %41 = arith.addf %39, %40 : vector<8x128xf32>
    %42 = arith.negf %41 : vector<8x128xf32>
    %43 = math.exp %42 : vector<8x128xf32>
    %cst_11 = arith.constant 1.000000e+00 : f32
    %44 = vector.broadcast %cst_11 : f32 to vector<8x128xf32>
    %45 = arith.addf %44, %43 : vector<8x128xf32>
    %46 = arith.divf %44, %45 : vector<8x128xf32>
    %47 = vector.extract_strided_slice %46 {offsets = [0, 0], sizes = [8, 32], strides = [1, 1]} : vector<8x128xf32> to vector<8x32xf32>
    %48 = vector.extract_strided_slice %46 {offsets = [0, 32], sizes = [8, 32], strides = [1, 1]} : vector<8x128xf32> to vector<8x32xf32>
    %49 = vector.extract_strided_slice %46 {offsets = [0, 96], sizes = [8, 32], strides = [1, 1]} : vector<8x128xf32> to vector<8x32xf32>
    %50 = vector.extract_strided_slice %41 {offsets = [0, 64], sizes = [8, 32], strides = [1, 1]} : vector<8x128xf32> to vector<8x32xf32>
    %51 = math.tanh %50 : vector<8x32xf32>
    %52 = arith.mulf %48, %36 : vector<8x32xf32>
    %53 = arith.mulf %47, %51 : vector<8x32xf32>
    %54 = arith.addf %52, %53 : vector<8x32xf32>
    %55 = math.tanh %54 : vector<8x32xf32>
    %56 = arith.mulf %49, %55 : vector<8x32xf32>
    %57 = vector.extract_strided_slice %17 {offsets = [16, 0], sizes = [8, 128], strides = [1, 1]} : vector<64x128xf32> to vector<8x128xf32>
    %cst_12 = arith.constant dense<0.000000e+00> : vector<8x128xf32>
    %58 = tpu.matmul %56, %18, %cst_12 {dimension_numbers = #tpu.dot_dimension_numbers<[1], [0], [0], [1], [0, 0, 1, 1], [], []>} : vector<8x32xf32>, vector<32x128xf32>, vector<8x128xf32> -> vector<8x128xf32>
    %59 = arith.addf %57, %58 : vector<8x128xf32>
    %60 = arith.negf %59 : vector<8x128xf32>
    %61 = math.exp %60 : vector<8x128xf32>
    %cst_13 = arith.constant 1.000000e+00 : f32
    %62 = vector.broadcast %cst_13 : f32 to vector<8x128xf32>
    %63 = arith.addf %62, %61 : vector<8x128xf32>
    %64 = arith.divf %62, %63 : vector<8x128xf32>
    %65 = vector.extract_strided_slice %64 {offsets = [0, 0], sizes = [8, 32], strides = [1, 1]} : vector<8x128xf32> to vector<8x32xf32>
    %66 = vector.extract_strided_slice %64 {offsets = [0, 32], sizes = [8, 32], strides = [1, 1]} : vector<8x128xf32> to vector<8x32xf32>
    %67 = vector.extract_strided_slice %64 {offsets = [0, 96], sizes = [8, 32], strides = [1, 1]} : vector<8x128xf32> to vector<8x32xf32>
    %68 = vector.extract_strided_slice %59 {offsets = [0, 64], sizes = [8, 32], strides = [1, 1]} : vector<8x128xf32> to vector<8x32xf32>
    %69 = math.tanh %68 : vector<8x32xf32>
    %70 = arith.mulf %66, %54 : vector<8x32xf32>
    %71 = arith.mulf %65, %69 : vector<8x32xf32>
    %72 = arith.addf %70, %71 : vector<8x32xf32>
    %73 = math.tanh %72 : vector<8x32xf32>
    %74 = arith.mulf %67, %73 : vector<8x32xf32>
    %75 = vector.extract_strided_slice %17 {offsets = [24, 0], sizes = [8, 128], strides = [1, 1]} : vector<64x128xf32> to vector<8x128xf32>
    %cst_14 = arith.constant dense<0.000000e+00> : vector<8x128xf32>
    %76 = tpu.matmul %74, %18, %cst_14 {dimension_numbers = #tpu.dot_dimension_numbers<[1], [0], [0], [1], [0, 0, 1, 1], [], []>} : vector<8x32xf32>, vector<32x128xf32>, vector<8x128xf32> -> vector<8x128xf32>
    %77 = arith.addf %75, %76 : vector<8x128xf32>
    %78 = arith.negf %77 : vector<8x128xf32>
    %79 = math.exp %78 : vector<8x128xf32>
    %cst_15 = arith.constant 1.000000e+00 : f32
    %80 = vector.broadcast %cst_15 : f32 to vector<8x128xf32>
    %81 = arith.addf %80, %79 : vector<8x128xf32>
    %82 = arith.divf %80, %81 : vector<8x128xf32>
    %83 = vector.extract_strided_slice %82 {offsets = [0, 0], sizes = [8, 32], strides = [1, 1]} : vector<8x128xf32> to vector<8x32xf32>
    %84 = vector.extract_strided_slice %82 {offsets = [0, 32], sizes = [8, 32], strides = [1, 1]} : vector<8x128xf32> to vector<8x32xf32>
    %85 = vector.extract_strided_slice %82 {offsets = [0, 96], sizes = [8, 32], strides = [1, 1]} : vector<8x128xf32> to vector<8x32xf32>
    %86 = vector.extract_strided_slice %77 {offsets = [0, 64], sizes = [8, 32], strides = [1, 1]} : vector<8x128xf32> to vector<8x32xf32>
    %87 = math.tanh %86 : vector<8x32xf32>
    %88 = arith.mulf %84, %72 : vector<8x32xf32>
    %89 = arith.mulf %83, %87 : vector<8x32xf32>
    %90 = arith.addf %88, %89 : vector<8x32xf32>
    %91 = math.tanh %90 : vector<8x32xf32>
    %92 = arith.mulf %85, %91 : vector<8x32xf32>
    %93 = vector.extract_strided_slice %17 {offsets = [32, 0], sizes = [8, 128], strides = [1, 1]} : vector<64x128xf32> to vector<8x128xf32>
    %cst_16 = arith.constant dense<0.000000e+00> : vector<8x128xf32>
    %94 = tpu.matmul %92, %18, %cst_16 {dimension_numbers = #tpu.dot_dimension_numbers<[1], [0], [0], [1], [0, 0, 1, 1], [], []>} : vector<8x32xf32>, vector<32x128xf32>, vector<8x128xf32> -> vector<8x128xf32>
    %95 = arith.addf %93, %94 : vector<8x128xf32>
    %96 = arith.negf %95 : vector<8x128xf32>
    %97 = math.exp %96 : vector<8x128xf32>
    %cst_17 = arith.constant 1.000000e+00 : f32
    %98 = vector.broadcast %cst_17 : f32 to vector<8x128xf32>
    %99 = arith.addf %98, %97 : vector<8x128xf32>
    %100 = arith.divf %98, %99 : vector<8x128xf32>
    %101 = vector.extract_strided_slice %100 {offsets = [0, 0], sizes = [8, 32], strides = [1, 1]} : vector<8x128xf32> to vector<8x32xf32>
    %102 = vector.extract_strided_slice %100 {offsets = [0, 32], sizes = [8, 32], strides = [1, 1]} : vector<8x128xf32> to vector<8x32xf32>
    %103 = vector.extract_strided_slice %100 {offsets = [0, 96], sizes = [8, 32], strides = [1, 1]} : vector<8x128xf32> to vector<8x32xf32>
    %104 = vector.extract_strided_slice %95 {offsets = [0, 64], sizes = [8, 32], strides = [1, 1]} : vector<8x128xf32> to vector<8x32xf32>
    %105 = math.tanh %104 : vector<8x32xf32>
    %106 = arith.mulf %102, %90 : vector<8x32xf32>
    %107 = arith.mulf %101, %105 : vector<8x32xf32>
    %108 = arith.addf %106, %107 : vector<8x32xf32>
    %109 = math.tanh %108 : vector<8x32xf32>
    %110 = arith.mulf %103, %109 : vector<8x32xf32>
    %111 = vector.extract_strided_slice %17 {offsets = [40, 0], sizes = [8, 128], strides = [1, 1]} : vector<64x128xf32> to vector<8x128xf32>
    %cst_18 = arith.constant dense<0.000000e+00> : vector<8x128xf32>
    %112 = tpu.matmul %110, %18, %cst_18 {dimension_numbers = #tpu.dot_dimension_numbers<[1], [0], [0], [1], [0, 0, 1, 1], [], []>} : vector<8x32xf32>, vector<32x128xf32>, vector<8x128xf32> -> vector<8x128xf32>
    %113 = arith.addf %111, %112 : vector<8x128xf32>
    %114 = arith.negf %113 : vector<8x128xf32>
    %115 = math.exp %114 : vector<8x128xf32>
    %cst_19 = arith.constant 1.000000e+00 : f32
    %116 = vector.broadcast %cst_19 : f32 to vector<8x128xf32>
    %117 = arith.addf %116, %115 : vector<8x128xf32>
    %118 = arith.divf %116, %117 : vector<8x128xf32>
    %119 = vector.extract_strided_slice %118 {offsets = [0, 0], sizes = [8, 32], strides = [1, 1]} : vector<8x128xf32> to vector<8x32xf32>
    %120 = vector.extract_strided_slice %118 {offsets = [0, 32], sizes = [8, 32], strides = [1, 1]} : vector<8x128xf32> to vector<8x32xf32>
    %121 = vector.extract_strided_slice %118 {offsets = [0, 96], sizes = [8, 32], strides = [1, 1]} : vector<8x128xf32> to vector<8x32xf32>
    %122 = vector.extract_strided_slice %113 {offsets = [0, 64], sizes = [8, 32], strides = [1, 1]} : vector<8x128xf32> to vector<8x32xf32>
    %123 = math.tanh %122 : vector<8x32xf32>
    %124 = arith.mulf %120, %108 : vector<8x32xf32>
    %125 = arith.mulf %119, %123 : vector<8x32xf32>
    %126 = arith.addf %124, %125 : vector<8x32xf32>
    %127 = math.tanh %126 : vector<8x32xf32>
    %128 = arith.mulf %121, %127 : vector<8x32xf32>
    %129 = vector.extract_strided_slice %17 {offsets = [48, 0], sizes = [8, 128], strides = [1, 1]} : vector<64x128xf32> to vector<8x128xf32>
    %cst_20 = arith.constant dense<0.000000e+00> : vector<8x128xf32>
    %130 = tpu.matmul %128, %18, %cst_20 {dimension_numbers = #tpu.dot_dimension_numbers<[1], [0], [0], [1], [0, 0, 1, 1], [], []>} : vector<8x32xf32>, vector<32x128xf32>, vector<8x128xf32> -> vector<8x128xf32>
    %131 = arith.addf %129, %130 : vector<8x128xf32>
    %132 = arith.negf %131 : vector<8x128xf32>
    %133 = math.exp %132 : vector<8x128xf32>
    %cst_21 = arith.constant 1.000000e+00 : f32
    %134 = vector.broadcast %cst_21 : f32 to vector<8x128xf32>
    %135 = arith.addf %134, %133 : vector<8x128xf32>
    %136 = arith.divf %134, %135 : vector<8x128xf32>
    %137 = vector.extract_strided_slice %136 {offsets = [0, 0], sizes = [8, 32], strides = [1, 1]} : vector<8x128xf32> to vector<8x32xf32>
    %138 = vector.extract_strided_slice %136 {offsets = [0, 32], sizes = [8, 32], strides = [1, 1]} : vector<8x128xf32> to vector<8x32xf32>
    %139 = vector.extract_strided_slice %136 {offsets = [0, 96], sizes = [8, 32], strides = [1, 1]} : vector<8x128xf32> to vector<8x32xf32>
    %140 = vector.extract_strided_slice %131 {offsets = [0, 64], sizes = [8, 32], strides = [1, 1]} : vector<8x128xf32> to vector<8x32xf32>
    %141 = math.tanh %140 : vector<8x32xf32>
    %142 = arith.mulf %138, %126 : vector<8x32xf32>
    %143 = arith.mulf %137, %141 : vector<8x32xf32>
    %144 = arith.addf %142, %143 : vector<8x32xf32>
    %145 = math.tanh %144 : vector<8x32xf32>
    %146 = arith.mulf %139, %145 : vector<8x32xf32>
    %147 = vector.extract_strided_slice %17 {offsets = [56, 0], sizes = [8, 128], strides = [1, 1]} : vector<64x128xf32> to vector<8x128xf32>
    %cst_22 = arith.constant dense<0.000000e+00> : vector<8x128xf32>
    %148 = tpu.matmul %146, %18, %cst_22 {dimension_numbers = #tpu.dot_dimension_numbers<[1], [0], [0], [1], [0, 0, 1, 1], [], []>} : vector<8x32xf32>, vector<32x128xf32>, vector<8x128xf32> -> vector<8x128xf32>
    %149 = arith.addf %147, %148 : vector<8x128xf32>
    %150 = arith.negf %149 : vector<8x128xf32>
    %151 = math.exp %150 : vector<8x128xf32>
    %cst_23 = arith.constant 1.000000e+00 : f32
    %152 = vector.broadcast %cst_23 : f32 to vector<8x128xf32>
    %153 = arith.addf %152, %151 : vector<8x128xf32>
    %154 = arith.divf %152, %153 : vector<8x128xf32>
    %155 = vector.extract_strided_slice %154 {offsets = [0, 0], sizes = [8, 32], strides = [1, 1]} : vector<8x128xf32> to vector<8x32xf32>
    %156 = vector.extract_strided_slice %154 {offsets = [0, 32], sizes = [8, 32], strides = [1, 1]} : vector<8x128xf32> to vector<8x32xf32>
    %157 = vector.extract_strided_slice %154 {offsets = [0, 96], sizes = [8, 32], strides = [1, 1]} : vector<8x128xf32> to vector<8x32xf32>
    %158 = vector.extract_strided_slice %149 {offsets = [0, 64], sizes = [8, 32], strides = [1, 1]} : vector<8x128xf32> to vector<8x32xf32>
    %159 = math.tanh %158 : vector<8x32xf32>
    %160 = arith.mulf %156, %144 : vector<8x32xf32>
    %161 = arith.mulf %155, %159 : vector<8x32xf32>
    %162 = arith.addf %160, %161 : vector<8x32xf32>
    %163 = math.tanh %162 : vector<8x32xf32>
    %164 = arith.mulf %157, %163 : vector<8x32xf32>
    %c0_24 = arith.constant 0 : index
    %c0_25 = arith.constant 0 : index
    %165 = vector.load %arg3[%c0_24, %c0_25] : memref<32x128xf32, #tpu.memory_space<vmem>>, vector<32x128xf32>
    %cst_26 = arith.constant dense<0.000000e+00> : vector<8x128xf32>
    %166 = tpu.matmul %164, %165, %cst_26 {dimension_numbers = #tpu.dot_dimension_numbers<[1], [0], [0], [1], [0, 0, 1, 1], [], []>} : vector<8x32xf32>, vector<32x128xf32>, vector<8x128xf32> -> vector<8x128xf32>
    %c0_27 = arith.constant 0 : index
    %c0_28 = arith.constant 0 : index
    %167 = vector.load %arg8[%c0_27, %c0_28] : memref<8x128xf32, #tpu.memory_space<vmem>>, vector<1x128xf32>
    %168 = vector.broadcast %167 : vector<1x128xf32> to vector<8x128xf32>
    %169 = arith.addf %166, %168 : vector<8x128xf32>
    %c0_29 = arith.constant 0 : index
    %c0_30 = arith.constant 0 : index
    %170 = vector.load %arg9[%c0_29, %c0_30] : memref<8x128xf32, #tpu.memory_space<vmem>>, vector<8x128xf32>
    tpu.vector_store %arg9[%c0_29, %c0_30], %169 {strides = array<i32>} : memref<8x128xf32, #tpu.memory_space<vmem>>, vector<8x128xf32>,
    %c0_31 = arith.constant 0 : index
    %c0_32 = arith.constant 0 : index
    %171 = vector.load %arg4[%c0_31, %c0_32] : memref<128x16xf32, #tpu.memory_space<vmem>>, vector<128x16xf32>
    %cst_33 = arith.constant dense<0.000000e+00> : vector<8x16xf32>
    %172 = tpu.matmul %169, %171, %cst_33 {dimension_numbers = #tpu.dot_dimension_numbers<[1], [0], [0], [1], [0, 0, 1, 1], [], []>} : vector<8x128xf32>, vector<128x16xf32>, vector<8x16xf32> -> vector<8x16xf32>
    %c1 = arith.constant 1 : index
    %c0_34 = arith.constant 0 : index
    %173 = vector.load %arg8[%c1, %c0_34] : memref<8x128xf32, #tpu.memory_space<vmem>>, vector<1x16xf32>
    %174 = vector.broadcast %173 : vector<1x16xf32> to vector<8x16xf32>
    %175 = arith.addf %172, %174 : vector<8x16xf32>
    %c0_35 = arith.constant 0 : index
    %c0_36 = arith.constant 0 : index
    %176 = vector.load %arg5[%c0_35, %c0_36] : memref<16x128xf32, #tpu.memory_space<vmem>>, vector<16x128xf32>
    %cst_37 = arith.constant dense<0.000000e+00> : vector<8x128xf32>
    %177 = tpu.matmul %175, %176, %cst_37 {dimension_numbers = #tpu.dot_dimension_numbers<[1], [0], [0], [1], [0, 0, 1, 1], [], []>} : vector<8x16xf32>, vector<16x128xf32>, vector<8x128xf32> -> vector<8x128xf32>
    %c2 = arith.constant 2 : index
    %c0_38 = arith.constant 0 : index
    %178 = vector.load %arg8[%c2, %c0_38] : memref<8x128xf32, #tpu.memory_space<vmem>>, vector<1x128xf32>
    %179 = vector.broadcast %178 : vector<1x128xf32> to vector<8x128xf32>
    %180 = arith.addf %177, %179 : vector<8x128xf32>
    %c0_39 = arith.constant 0 : index
    %c0_40 = arith.constant 0 : index
    %181 = vector.load %arg6[%c0_39, %c0_40] : memref<32x128xf32, #tpu.memory_space<vmem>>, vector<32x128xf32>
    %cst_41 = arith.constant 0.000000e+00 : f32
    %182 = vector.broadcast %cst_41 : f32 to vector<8x32xf32>
    %cst_42 = arith.constant 0.000000e+00 : f32
    %183 = vector.broadcast %cst_42 : f32 to vector<8x32xf32>
    %cst_43 = arith.constant dense<0.000000e+00> : vector<8x128xf32>
    %184 = tpu.matmul %182, %181, %cst_43 {dimension_numbers = #tpu.dot_dimension_numbers<[1], [0], [0], [1], [0, 0, 1, 1], [], []>} : vector<8x32xf32>, vector<32x128xf32>, vector<8x128xf32> -> vector<8x128xf32>
    %185 = arith.addf %180, %184 : vector<8x128xf32>
    %186 = arith.negf %185 : vector<8x128xf32>
    %187 = math.exp %186 : vector<8x128xf32>
    %cst_44 = arith.constant 1.000000e+00 : f32
    %188 = vector.broadcast %cst_44 : f32 to vector<8x128xf32>
    %189 = arith.addf %188, %187 : vector<8x128xf32>
    %190 = arith.divf %188, %189 : vector<8x128xf32>
    %191 = vector.extract_strided_slice %190 {offsets = [0, 0], sizes = [8, 32], strides = [1, 1]} : vector<8x128xf32> to vector<8x32xf32>
    %192 = vector.extract_strided_slice %190 {offsets = [0, 32], sizes = [8, 32], strides = [1, 1]} : vector<8x128xf32> to vector<8x32xf32>
    %193 = vector.extract_strided_slice %190 {offsets = [0, 96], sizes = [8, 32], strides = [1, 1]} : vector<8x128xf32> to vector<8x32xf32>
    %194 = vector.extract_strided_slice %185 {offsets = [0, 64], sizes = [8, 32], strides = [1, 1]} : vector<8x128xf32> to vector<8x32xf32>
    %195 = math.tanh %194 : vector<8x32xf32>
    %196 = arith.mulf %192, %183 : vector<8x32xf32>
    %197 = arith.mulf %191, %195 : vector<8x32xf32>
    %198 = arith.addf %196, %197 : vector<8x32xf32>
    %199 = math.tanh %198 : vector<8x32xf32>
    %200 = arith.mulf %193, %199 : vector<8x32xf32>
    %cst_45 = arith.constant dense<0.000000e+00> : vector<8x128xf32>
    %201 = tpu.matmul %200, %181, %cst_45 {dimension_numbers = #tpu.dot_dimension_numbers<[1], [0], [0], [1], [0, 0, 1, 1], [], []>} : vector<8x32xf32>, vector<32x128xf32>, vector<8x128xf32> -> vector<8x128xf32>
    %202 = arith.addf %180, %201 : vector<8x128xf32>
    %203 = arith.negf %202 : vector<8x128xf32>
    %204 = math.exp %203 : vector<8x128xf32>
    %cst_46 = arith.constant 1.000000e+00 : f32
    %205 = vector.broadcast %cst_46 : f32 to vector<8x128xf32>
    %206 = arith.addf %205, %204 : vector<8x128xf32>
    %207 = arith.divf %205, %206 : vector<8x128xf32>
    %208 = vector.extract_strided_slice %207 {offsets = [0, 0], sizes = [8, 32], strides = [1, 1]} : vector<8x128xf32> to vector<8x32xf32>
    %209 = vector.extract_strided_slice %207 {offsets = [0, 32], sizes = [8, 32], strides = [1, 1]} : vector<8x128xf32> to vector<8x32xf32>
    %210 = vector.extract_strided_slice %207 {offsets = [0, 96], sizes = [8, 32], strides = [1, 1]} : vector<8x128xf32> to vector<8x32xf32>
    %211 = vector.extract_strided_slice %202 {offsets = [0, 64], sizes = [8, 32], strides = [1, 1]} : vector<8x128xf32> to vector<8x32xf32>
    %212 = math.tanh %211 : vector<8x32xf32>
    %213 = arith.mulf %209, %198 : vector<8x32xf32>
    %214 = arith.mulf %208, %212 : vector<8x32xf32>
    %215 = arith.addf %213, %214 : vector<8x32xf32>
    %216 = math.tanh %215 : vector<8x32xf32>
    %217 = arith.mulf %210, %216 : vector<8x32xf32>
    %cst_47 = arith.constant dense<0.000000e+00> : vector<8x128xf32>
    %218 = tpu.matmul %217, %181, %cst_47 {dimension_numbers = #tpu.dot_dimension_numbers<[1], [0], [0], [1], [0, 0, 1, 1], [], []>} : vector<8x32xf32>, vector<32x128xf32>, vector<8x128xf32> -> vector<8x128xf32>
    %219 = arith.addf %180, %218 : vector<8x128xf32>
    %220 = arith.negf %219 : vector<8x128xf32>
    %221 = math.exp %220 : vector<8x128xf32>
    %cst_48 = arith.constant 1.000000e+00 : f32
    %222 = vector.broadcast %cst_48 : f32 to vector<8x128xf32>
    %223 = arith.addf %222, %221 : vector<8x128xf32>
    %224 = arith.divf %222, %223 : vector<8x128xf32>
    %225 = vector.extract_strided_slice %224 {offsets = [0, 0], sizes = [8, 32], strides = [1, 1]} : vector<8x128xf32> to vector<8x32xf32>
    %226 = vector.extract_strided_slice %224 {offsets = [0, 32], sizes = [8, 32], strides = [1, 1]} : vector<8x128xf32> to vector<8x32xf32>
    %227 = vector.extract_strided_slice %224 {offsets = [0, 96], sizes = [8, 32], strides = [1, 1]} : vector<8x128xf32> to vector<8x32xf32>
    %228 = vector.extract_strided_slice %219 {offsets = [0, 64], sizes = [8, 32], strides = [1, 1]} : vector<8x128xf32> to vector<8x32xf32>
    %229 = math.tanh %228 : vector<8x32xf32>
    %230 = arith.mulf %226, %215 : vector<8x32xf32>
    %231 = arith.mulf %225, %229 : vector<8x32xf32>
    %232 = arith.addf %230, %231 : vector<8x32xf32>
    %233 = math.tanh %232 : vector<8x32xf32>
    %234 = arith.mulf %227, %233 : vector<8x32xf32>
    %cst_49 = arith.constant dense<0.000000e+00> : vector<8x128xf32>
    %235 = tpu.matmul %234, %181, %cst_49 {dimension_numbers = #tpu.dot_dimension_numbers<[1], [0], [0], [1], [0, 0, 1, 1], [], []>} : vector<8x32xf32>, vector<32x128xf32>, vector<8x128xf32> -> vector<8x128xf32>
    %236 = arith.addf %180, %235 : vector<8x128xf32>
    %237 = arith.negf %236 : vector<8x128xf32>
    %238 = math.exp %237 : vector<8x128xf32>
    %cst_50 = arith.constant 1.000000e+00 : f32
    %239 = vector.broadcast %cst_50 : f32 to vector<8x128xf32>
    %240 = arith.addf %239, %238 : vector<8x128xf32>
    %241 = arith.divf %239, %240 : vector<8x128xf32>
    %242 = vector.extract_strided_slice %241 {offsets = [0, 0], sizes = [8, 32], strides = [1, 1]} : vector<8x128xf32> to vector<8x32xf32>
    %243 = vector.extract_strided_slice %241 {offsets = [0, 32], sizes = [8, 32], strides = [1, 1]} : vector<8x128xf32> to vector<8x32xf32>
    %244 = vector.extract_strided_slice %241 {offsets = [0, 96], sizes = [8, 32], strides = [1, 1]} : vector<8x128xf32> to vector<8x32xf32>
    %245 = vector.extract_strided_slice %236 {offsets = [0, 64], sizes = [8, 32], strides = [1, 1]} : vector<8x128xf32> to vector<8x32xf32>
    %246 = math.tanh %245 : vector<8x32xf32>
    %247 = arith.mulf %243, %232 : vector<8x32xf32>
    %248 = arith.mulf %242, %246 : vector<8x32xf32>
    %249 = arith.addf %247, %248 : vector<8x32xf32>
    %250 = math.tanh %249 : vector<8x32xf32>
    %251 = arith.mulf %244, %250 : vector<8x32xf32>
    %cst_51 = arith.constant dense<0.000000e+00> : vector<8x128xf32>
    %252 = tpu.matmul %251, %181, %cst_51 {dimension_numbers = #tpu.dot_dimension_numbers<[1], [0], [0], [1], [0, 0, 1, 1], [], []>} : vector<8x32xf32>, vector<32x128xf32>, vector<8x128xf32> -> vector<8x128xf32>
    %253 = arith.addf %180, %252 : vector<8x128xf32>
    %254 = arith.negf %253 : vector<8x128xf32>
    %255 = math.exp %254 : vector<8x128xf32>
    %cst_52 = arith.constant 1.000000e+00 : f32
    %256 = vector.broadcast %cst_52 : f32 to vector<8x128xf32>
    %257 = arith.addf %256, %255 : vector<8x128xf32>
    %258 = arith.divf %256, %257 : vector<8x128xf32>
    %259 = vector.extract_strided_slice %258 {offsets = [0, 0], sizes = [8, 32], strides = [1, 1]} : vector<8x128xf32> to vector<8x32xf32>
    %260 = vector.extract_strided_slice %258 {offsets = [0, 32], sizes = [8, 32], strides = [1, 1]} : vector<8x128xf32> to vector<8x32xf32>
    %261 = vector.extract_strided_slice %258 {offsets = [0, 96], sizes = [8, 32], strides = [1, 1]} : vector<8x128xf32> to vector<8x32xf32>
    %262 = vector.extract_strided_slice %253 {offsets = [0, 64], sizes = [8, 32], strides = [1, 1]} : vector<8x128xf32> to vector<8x32xf32>
    %263 = math.tanh %262 : vector<8x32xf32>
    %264 = arith.mulf %260, %249 : vector<8x32xf32>
    %265 = arith.mulf %259, %263 : vector<8x32xf32>
    %266 = arith.addf %264, %265 : vector<8x32xf32>
    %267 = math.tanh %266 : vector<8x32xf32>
    %268 = arith.mulf %261, %267 : vector<8x32xf32>
    %cst_53 = arith.constant dense<0.000000e+00> : vector<8x128xf32>
    %269 = tpu.matmul %268, %181, %cst_53 {dimension_numbers = #tpu.dot_dimension_numbers<[1], [0], [0], [1], [0, 0, 1, 1], [], []>} : vector<8x32xf32>, vector<32x128xf32>, vector<8x128xf32> -> vector<8x128xf32>
    %270 = arith.addf %180, %269 : vector<8x128xf32>
    %271 = arith.negf %270 : vector<8x128xf32>
    %272 = math.exp %271 : vector<8x128xf32>
    %cst_54 = arith.constant 1.000000e+00 : f32
    %273 = vector.broadcast %cst_54 : f32 to vector<8x128xf32>
    %274 = arith.addf %273, %272 : vector<8x128xf32>
    %275 = arith.divf %273, %274 : vector<8x128xf32>
    %276 = vector.extract_strided_slice %275 {offsets = [0, 0], sizes = [8, 32], strides = [1, 1]} : vector<8x128xf32> to vector<8x32xf32>
    %277 = vector.extract_strided_slice %275 {offsets = [0, 32], sizes = [8, 32], strides = [1, 1]} : vector<8x128xf32> to vector<8x32xf32>
    %278 = vector.extract_strided_slice %275 {offsets = [0, 96], sizes = [8, 32], strides = [1, 1]} : vector<8x128xf32> to vector<8x32xf32>
    %279 = vector.extract_strided_slice %270 {offsets = [0, 64], sizes = [8, 32], strides = [1, 1]} : vector<8x128xf32> to vector<8x32xf32>
    %280 = math.tanh %279 : vector<8x32xf32>
    %281 = arith.mulf %277, %266 : vector<8x32xf32>
    %282 = arith.mulf %276, %280 : vector<8x32xf32>
    %283 = arith.addf %281, %282 : vector<8x32xf32>
    %284 = math.tanh %283 : vector<8x32xf32>
    %285 = arith.mulf %278, %284 : vector<8x32xf32>
    %cst_55 = arith.constant dense<0.000000e+00> : vector<8x128xf32>
    %286 = tpu.matmul %285, %181, %cst_55 {dimension_numbers = #tpu.dot_dimension_numbers<[1], [0], [0], [1], [0, 0, 1, 1], [], []>} : vector<8x32xf32>, vector<32x128xf32>, vector<8x128xf32> -> vector<8x128xf32>
    %287 = arith.addf %180, %286 : vector<8x128xf32>
    %288 = arith.negf %287 : vector<8x128xf32>
    %289 = math.exp %288 : vector<8x128xf32>
    %cst_56 = arith.constant 1.000000e+00 : f32
    %290 = vector.broadcast %cst_56 : f32 to vector<8x128xf32>
    %291 = arith.addf %290, %289 : vector<8x128xf32>
    %292 = arith.divf %290, %291 : vector<8x128xf32>
    %293 = vector.extract_strided_slice %292 {offsets = [0, 0], sizes = [8, 32], strides = [1, 1]} : vector<8x128xf32> to vector<8x32xf32>
    %294 = vector.extract_strided_slice %292 {offsets = [0, 32], sizes = [8, 32], strides = [1, 1]} : vector<8x128xf32> to vector<8x32xf32>
    %295 = vector.extract_strided_slice %292 {offsets = [0, 96], sizes = [8, 32], strides = [1, 1]} : vector<8x128xf32> to vector<8x32xf32>
    %296 = vector.extract_strided_slice %287 {offsets = [0, 64], sizes = [8, 32], strides = [1, 1]} : vector<8x128xf32> to vector<8x32xf32>
    %297 = math.tanh %296 : vector<8x32xf32>
    %298 = arith.mulf %294, %283 : vector<8x32xf32>
    %299 = arith.mulf %293, %297 : vector<8x32xf32>
    %300 = arith.addf %298, %299 : vector<8x32xf32>
    %301 = math.tanh %300 : vector<8x32xf32>
    %302 = arith.mulf %295, %301 : vector<8x32xf32>
    %cst_57 = arith.constant dense<0.000000e+00> : vector<8x128xf32>
    %303 = tpu.matmul %302, %181, %cst_57 {dimension_numbers = #tpu.dot_dimension_numbers<[1], [0], [0], [1], [0, 0, 1, 1], [], []>} : vector<8x32xf32>, vector<32x128xf32>, vector<8x128xf32> -> vector<8x128xf32>
    %304 = arith.addf %180, %303 : vector<8x128xf32>
    %305 = arith.negf %304 : vector<8x128xf32>
    %306 = math.exp %305 : vector<8x128xf32>
    %cst_58 = arith.constant 1.000000e+00 : f32
    %307 = vector.broadcast %cst_58 : f32 to vector<8x128xf32>
    %308 = arith.addf %307, %306 : vector<8x128xf32>
    %309 = arith.divf %307, %308 : vector<8x128xf32>
    %310 = vector.extract_strided_slice %309 {offsets = [0, 0], sizes = [8, 32], strides = [1, 1]} : vector<8x128xf32> to vector<8x32xf32>
    %311 = vector.extract_strided_slice %309 {offsets = [0, 32], sizes = [8, 32], strides = [1, 1]} : vector<8x128xf32> to vector<8x32xf32>
    %312 = vector.extract_strided_slice %309 {offsets = [0, 96], sizes = [8, 32], strides = [1, 1]} : vector<8x128xf32> to vector<8x32xf32>
    %313 = vector.extract_strided_slice %304 {offsets = [0, 64], sizes = [8, 32], strides = [1, 1]} : vector<8x128xf32> to vector<8x32xf32>
    %314 = math.tanh %313 : vector<8x32xf32>
    %315 = arith.mulf %311, %300 : vector<8x32xf32>
    %316 = arith.mulf %310, %314 : vector<8x32xf32>
    %317 = arith.addf %315, %316 : vector<8x32xf32>
    %318 = math.tanh %317 : vector<8x32xf32>
    %319 = arith.mulf %312, %318 : vector<8x32xf32>
    %320 = vector.extract_strided_slice %200 {offsets = [0, 0], sizes = [8, 16], strides = [1, 1]} : vector<8x32xf32> to vector<8x16xf32>
    %321 = vector.extract_strided_slice %319 {offsets = [0, 16], sizes = [8, 16], strides = [1, 1]} : vector<8x32xf32> to vector<8x16xf32>
    %322 = tpu.concatenate %320, %321 in 1 : vector<8x16xf32>, vector<8x16xf32> -> vector<8x32xf32>
    %323 = vector.extract_strided_slice %217 {offsets = [0, 0], sizes = [8, 16], strides = [1, 1]} : vector<8x32xf32> to vector<8x16xf32>
    %324 = vector.extract_strided_slice %302 {offsets = [0, 16], sizes = [8, 16], strides = [1, 1]} : vector<8x32xf32> to vector<8x16xf32>
    %325 = tpu.concatenate %323, %324 in 1 : vector<8x16xf32>, vector<8x16xf32> -> vector<8x32xf32>
    %326 = vector.extract_strided_slice %234 {offsets = [0, 0], sizes = [8, 16], strides = [1, 1]} : vector<8x32xf32> to vector<8x16xf32>
    %327 = vector.extract_strided_slice %285 {offsets = [0, 16], sizes = [8, 16], strides = [1, 1]} : vector<8x32xf32> to vector<8x16xf32>
    %328 = tpu.concatenate %326, %327 in 1 : vector<8x16xf32>, vector<8x16xf32> -> vector<8x32xf32>
    %329 = vector.extract_strided_slice %251 {offsets = [0, 0], sizes = [8, 16], strides = [1, 1]} : vector<8x32xf32> to vector<8x16xf32>
    %330 = vector.extract_strided_slice %268 {offsets = [0, 16], sizes = [8, 16], strides = [1, 1]} : vector<8x32xf32> to vector<8x16xf32>
    %331 = tpu.concatenate %329, %330 in 1 : vector<8x16xf32>, vector<8x16xf32> -> vector<8x32xf32>
    %332 = vector.extract_strided_slice %268 {offsets = [0, 0], sizes = [8, 16], strides = [1, 1]} : vector<8x32xf32> to vector<8x16xf32>
    %333 = vector.extract_strided_slice %251 {offsets = [0, 16], sizes = [8, 16], strides = [1, 1]} : vector<8x32xf32> to vector<8x16xf32>
    %334 = tpu.concatenate %332, %333 in 1 : vector<8x16xf32>, vector<8x16xf32> -> vector<8x32xf32>
    %335 = vector.extract_strided_slice %285 {offsets = [0, 0], sizes = [8, 16], strides = [1, 1]} : vector<8x32xf32> to vector<8x16xf32>
    %336 = vector.extract_strided_slice %234 {offsets = [0, 16], sizes = [8, 16], strides = [1, 1]} : vector<8x32xf32> to vector<8x16xf32>
    %337 = tpu.concatenate %335, %336 in 1 : vector<8x16xf32>, vector<8x16xf32> -> vector<8x32xf32>
    %338 = vector.extract_strided_slice %302 {offsets = [0, 0], sizes = [8, 16], strides = [1, 1]} : vector<8x32xf32> to vector<8x16xf32>
    %339 = vector.extract_strided_slice %217 {offsets = [0, 16], sizes = [8, 16], strides = [1, 1]} : vector<8x32xf32> to vector<8x16xf32>
    %340 = tpu.concatenate %338, %339 in 1 : vector<8x16xf32>, vector<8x16xf32> -> vector<8x32xf32>
    %341 = vector.extract_strided_slice %319 {offsets = [0, 0], sizes = [8, 16], strides = [1, 1]} : vector<8x32xf32> to vector<8x16xf32>
    %342 = vector.extract_strided_slice %200 {offsets = [0, 16], sizes = [8, 16], strides = [1, 1]} : vector<8x32xf32> to vector<8x16xf32>
    %343 = tpu.concatenate %341, %342 in 1 : vector<8x16xf32>, vector<8x16xf32> -> vector<8x32xf32>
    %344 = tpu.concatenate %322, %325, %328, %331, %334, %337, %340, %343 in 0 : vector<8x32xf32>, vector<8x32xf32>, vector<8x32xf32>, vector<8x32xf32>, vector<8x32xf32>, vector<8x32xf32>, vector<8x32xf32>, vector<8x32xf32> -> vector<64x32xf32>
    %c0_59 = arith.constant 0 : index
    %c0_60 = arith.constant 0 : index
    %345 = vector.load %arg7[%c0_59, %c0_60] : memref<32x128xf32, #tpu.memory_space<vmem>>, vector<32x128xf32>
    %cst_61 = arith.constant dense<0.000000e+00> : vector<64x128xf32>
    %346 = tpu.matmul %344, %345, %cst_61 {dimension_numbers = #tpu.dot_dimension_numbers<[1], [0], [0], [1], [0, 0, 1, 1], [], []>} : vector<64x32xf32>, vector<32x128xf32>, vector<64x128xf32> -> vector<64x128xf32>
    %c3 = arith.constant 3 : index
    %c0_62 = arith.constant 0 : index
    %347 = vector.load %arg8[%c3, %c0_62] : memref<8x128xf32, #tpu.memory_space<vmem>>, vector<1x128xf32>
    %348 = vector.broadcast %347 : vector<1x128xf32> to vector<64x128xf32>
    %349 = arith.addf %346, %348 : vector<64x128xf32>
    %c0_63 = arith.constant 0 : index
    %c0_64 = arith.constant 0 : index
    %350 = vector.load %arg10[%c0_63, %c0_64] : memref<64x128xf32, #tpu.memory_space<vmem>>, vector<64x128xf32>
    tpu.vector_store %arg10[%c0_63, %c0_64], %349 {strides = array<i32>} : memref<64x128xf32, #tpu.memory_space<vmem>>, vector<64x128xf32>,
    return
  }
}

</mosaic_0001>

<llo_original>
// kernel: autoencoder_forward.1
$region0: #{autoencoder_forward.1}
  #allocation0 [shape = 'u32[]', space=smem, size = 0x4, offset = 0x4, fixed_abs, tag = 'smem constant byte address 0x4 - core index']
  #allocation1 [shape = 'u32[144,128]{1,0:T(1,128)}', space=vmem, size = 0x12000, scoped, tag = 'internal scratch']
  %s0 = inlined_call_operand.vmem [shape: s32[64,2], index: 0, kind: input, shape index: {}]
  %s1 = inlined_call_operand.hbm [shape: f32[16,128], index: 1, kind: input, shape index: {}]
  %s2 = inlined_call_operand.hbm [shape: f32[32,128], index: 2, kind: input, shape index: {}]
  %s3 = inlined_call_operand.hbm [shape: f32[32,128], index: 3, kind: input, shape index: {}]
  %s4 = inlined_call_operand.vmem [shape: f32[128,16], index: 4, kind: input, shape index: {}]
  %s5 = inlined_call_operand.hbm [shape: f32[16,128], index: 5, kind: input, shape index: {}]
  %s6 = inlined_call_operand.hbm [shape: f32[32,128], index: 6, kind: input, shape index: {}]
  %s7 = inlined_call_operand.vmem [shape: f32[32,128], index: 7, kind: input, shape index: {}]
  %s8 = inlined_call_operand.vmem [shape: f32[8,128], index: 8, kind: input, shape index: {}]
  %s9 = inlined_call_operand.vmem [shape: f32[8,128], index: 9, kind: output, shape index: {0}]
  %s10 = inlined_call_operand.vmem [shape: f32[64,128], index: 10, kind: output, shape index: {1}]
  %11 = xla_tuple %s9, %s10
  %s12 = sld [smem:[#allocation0]]
  $region74: #{autoencoder_forward.1} parent=0
    _
  %s14 = ssub.s32 1, %s12
  %s15 = scalar_select 0, %s14, %s12
  $region1: #{autoencoder_forward.1} parent=0
    #allocation2 [shape = 'u8[8192]{0}', space=vmem, size = 0x2000, scoped, tag = 'input window, operand 1, single buffered']
    #allocation3 [shape = 's32[1]{0}', space=sflag, size = 0x4, scoped, tag = 'scoped memory for autoencoder_forward.1']
    #allocation4 [shape = 'u8[16384]{0}', space=vmem, size = 0x4000, scoped, tag = 'input window, operand 2, single buffered']
    #allocation5 [shape = 's32[1]{0}', space=sflag, size = 0x4, scoped, tag = 'scoped memory for autoencoder_forward.1']
    #allocation6 [shape = 'u8[16384]{0}', space=vmem, size = 0x4000, scoped, tag = 'input window, operand 3, single buffered']
    #allocation7 [shape = 'u8[8192]{0}', space=vmem, size = 0x2000, scoped, tag = 'input window, operand 5, single buffered']
    #allocation8 [shape = 's32[1]{0}', space=sflag, size = 0x4, scoped, tag = 'scoped memory for autoencoder_forward.1']
    #allocation9 [shape = 'u8[16384]{0}', space=vmem, size = 0x4000, scoped, tag = 'input window, operand 6, single buffered']
    %16 = vsyncpa [#allocation3], 0
    %17 = vsyncpa [#allocation5], 0
    %18 = vsyncpa [#allocation8], 0
    // Predicated region
    $region2: #{autoencoder_forward.1} parent=1 // pred_check
      _
    $region3: #{autoencoder_forward.1} parent=1 // pred_check_branch
      %20 = sbr.rel (0) target = $region5
    $region4: #{autoencoder_forward.1} parent=1 // pred_region
      _
    $region5: #{autoencoder_forward.1} parent=1 // pred_fallthru
      _
    // Predicated region
    $region6: #{autoencoder_forward.1} parent=1 // pred_check
      _
    $region7: #{autoencoder_forward.1} parent=1 // pred_check_branch
      %22 = sbr.rel (0) target = $region9
    $region8: #{autoencoder_forward.1} parent=1 // pred_region
      %s24 = ssub.s32 256, 256
      %25 = vsyncadd [#allocation3], %s24
      %s26 = sshll.u32 [#allocation2], 4
      %s27 = int_to_ptr.vmem [resolvable:$true] %s26
      %32 = dma.hbm_to_vmem [thread:$0]  %s1, 256, %s27, [#allocation3], 128, 128, 8
    $region9: #{autoencoder_forward.1} parent=1 // pred_fallthru
      _
    // Predicated region
    $region10: #{autoencoder_forward.1} parent=1 // pred_check
      _
    $region11: #{autoencoder_forward.1} parent=1 // pred_check_branch
      %34 = sbr.rel (0) target = $region13
    $region12: #{autoencoder_forward.1} parent=1 // pred_region
      %s36 = ssub.s32 512, 512
      %37 = vsyncadd [#allocation5], %s36
      %s38 = sshll.u32 [#allocation4], 4
      %s39 = int_to_ptr.vmem [resolvable:$true] %s38
      %44 = dma.hbm_to_vmem [thread:$0]  %s2, 512, %s39, [#allocation5], 128, 128, 8
    $region13: #{autoencoder_forward.1} parent=1 // pred_fallthru
      _
    // Predicated region
    $region14: #{autoencoder_forward.1} parent=1 // pred_check
      _
    $region15: #{autoencoder_forward.1} parent=1 // pred_check_branch
      %46 = sbr.rel (0) target = $region17
    $region16: #{autoencoder_forward.1} parent=1 // pred_region
      %s48 = ssub.s32 512, 512
      %49 = vsyncadd [#allocation5], %s48
      %s50 = sshll.u32 [#allocation6], 4
      %s51 = int_to_ptr.vmem [resolvable:$true] %s50
      %56 = dma.hbm_to_vmem [thread:$0]  %s3, 512, %s51, [#allocation5], 128, 128, 8
    $region17: #{autoencoder_forward.1} parent=1 // pred_fallthru
      _
    // Predicated region
    $region18: #{autoencoder_forward.1} parent=1 // pred_check
      _
    $region19: #{autoencoder_forward.1} parent=1 // pred_check_branch
      %58 = sbr.rel (0) target = $region21
    $region20: #{autoencoder_forward.1} parent=1 // pred_region
      _
    $region21: #{autoencoder_forward.1} parent=1 // pred_fallthru
      _
    // Predicated region
    $region22: #{autoencoder_forward.1} parent=1 // pred_check
      _
    $region23: #{autoencoder_forward.1} parent=1 // pred_check_branch
      %60 = sbr.rel (0) target = $region25
    $region24: #{autoencoder_forward.1} parent=1 // pred_region
      %s62 = ssub.s32 256, 256
      %63 = vsyncadd [#allocation8], %s62
      %s64 = sshll.u32 [#allocation7], 4
      %s65 = int_to_ptr.vmem [resolvable:$true] %s64
      %70 = dma.hbm_to_vmem [thread:$0]  %s5, 256, %s65, [#allocation8], 128, 128, 8
    $region25: #{autoencoder_forward.1} parent=1 // pred_fallthru
      _
    // Predicated region
    $region26: #{autoencoder_forward.1} parent=1 // pred_check
      _
    $region27: #{autoencoder_forward.1} parent=1 // pred_check_branch
      %72 = sbr.rel (0) target = $region29
    $region28: #{autoencoder_forward.1} parent=1 // pred_region
      %s74 = ssub.s32 512, 512
      %75 = vsyncadd [#allocation8], %s74
      %s76 = sshll.u32 [#allocation9], 4
      %s77 = int_to_ptr.vmem [resolvable:$true] %s76
      %82 = dma.hbm_to_vmem [thread:$0]  %s6, 512, %s77, [#allocation8], 128, 128, 8
    $region29: #{autoencoder_forward.1} parent=1 // pred_fallthru
      _
    // Predicated region
    $region30: #{autoencoder_forward.1} parent=1 // pred_check
      _
    $region31: #{autoencoder_forward.1} parent=1 // pred_check_branch
      %84 = sbr.rel (0) target = $region33
    $region32: #{autoencoder_forward.1} parent=1 // pred_region
      _
    $region33: #{autoencoder_forward.1} parent=1 // pred_fallthru
      _
    // Predicated region
    $region34: #{autoencoder_forward.1} parent=1 // pred_check
      _
    $region35: #{autoencoder_forward.1} parent=1 // pred_check_branch
      %86 = sbr.rel (0) target = $region37
    $region36: #{autoencoder_forward.1} parent=1 // pred_region
      _
    $region37: #{autoencoder_forward.1} parent=1 // pred_fallthru
      _
    // Predicated region
    $region38: #{autoencoder_forward.1} parent=1 // pred_check
      _
    $region39: #{autoencoder_forward.1} parent=1 // pred_check_branch
      %88 = sbr.rel (0) target = $region41
    $region40: #{autoencoder_forward.1} parent=1 // pred_region
      %89 = dma.done [#allocation3], 256
    $region41: #{autoencoder_forward.1} parent=1 // pred_fallthru
      _
    // Predicated region
    $region42: #{autoencoder_forward.1} parent=1 // pred_check
      _
    $region43: #{autoencoder_forward.1} parent=1 // pred_check_branch
      %91 = sbr.rel (0) target = $region45
    $region44: #{autoencoder_forward.1} parent=1 // pred_region
      %92 = dma.done [#allocation5], 512
    $region45: #{autoencoder_forward.1} parent=1 // pred_fallthru
      _
    // Predicated region
    $region46: #{autoencoder_forward.1} parent=1 // pred_check
      _
    $region47: #{autoencoder_forward.1} parent=1 // pred_check_branch
      %94 = sbr.rel (0) target = $region49
    $region48: #{autoencoder_forward.1} parent=1 // pred_region
      %95 = dma.done [#allocation5], 512
    $region49: #{autoencoder_forward.1} parent=1 // pred_fallthru
      _
    // Predicated region
    $region50: #{autoencoder_forward.1} parent=1 // pred_check
      _
    $region51: #{autoencoder_forward.1} parent=1 // pred_check_branch
      %97 = sbr.rel (0) target = $region53
    $region52: #{autoencoder_forward.1} parent=1 // pred_region
      %98 = dma.done [#allocation8], 256
    $region53: #{autoencoder_forward.1} parent=1 // pred_fallthru
      _
    // Predicated region
    $region54: #{autoencoder_forward.1} parent=1 // pred_check
      _
    $region55: #{autoencoder_forward.1} parent=1 // pred_check_branch
      %100 = sbr.rel (0) target = $region57
    $region56: #{autoencoder_forward.1} parent=1 // pred_region
      %101 = dma.done [#allocation8], 512
    $region57: #{autoencoder_forward.1} parent=1 // pred_fallthru
      _
    %v102 = vld [vmem:[%s0] sm:$0xff]
    %v103 = vld [vmem:[%s0 + $0x8] sm:$0xff]
    %v104 = vld [vmem:[%s0 + $0x10] sm:$0xff]
    %v105 = vld [vmem:[%s0 + $0x18] sm:$0xff]
    %v106 = vld [vmem:[%s0 + $0x20] sm:$0xff]
    %v107 = vld [vmem:[%s0 + $0x28] sm:$0xff]
    %v108 = vld [vmem:[%s0 + $0x30] sm:$0xff]
    %v109 = vld [vmem:[%s0 + $0x38] sm:$0xff]
    %v110 = vlaneseq
    %v111 = vand.u32 %v110, 127
    %vm112 = vcmp.lt.s32.totalorder %v111, 8
    %v113 = vadd.s32 %v102, 8
    %v114 = vadd.s32 %v103, 8
    %v115 = vadd.s32 %v104, 8
    %v116 = vadd.s32 %v105, 8
    %v117 = vadd.s32 %v106, 8
    %v118 = vadd.s32 %v107, 8
    %v119 = vadd.s32 %v108, 8
    %v120 = vadd.s32 %v109, 8
    %121 = vset.pattern.permute.xlu0 0
    %122 = vperm.xlu0 %121, %v102
    %v123 = vpop.permute.xlu0 %122
    %124 = vset.pattern.permute.xlu0 0
    %125 = vperm.xlu0 %124, %v103
    %v126 = vpop.permute.xlu0 %125
    %127 = vset.pattern.permute.xlu0 0
    %128 = vperm.xlu0 %127, %v104
    %v129 = vpop.permute.xlu0 %128
    %130 = vset.pattern.permute.xlu0 0
    %131 = vperm.xlu0 %130, %v105
    %v132 = vpop.permute.xlu0 %131
    %133 = vset.pattern.permute.xlu0 0
    %134 = vperm.xlu0 %133, %v106
    %v135 = vpop.permute.xlu0 %134
    %136 = vset.pattern.permute.xlu0 0
    %137 = vperm.xlu0 %136, %v107
    %v138 = vpop.permute.xlu0 %137
    %139 = vset.pattern.permute.xlu0 0
    %140 = vperm.xlu0 %139, %v108
    %v141 = vpop.permute.xlu0 %140
    %142 = vset.pattern.permute.xlu0 0
    %143 = vperm.xlu0 %142, %v109
    %v144 = vpop.permute.xlu0 %143
    %145 = vset.pattern.permute.xlu0 1
    %146 = vperm.xlu0 %145, %v113
    %v147 = vpop.permute.xlu0 %146
    %148 = vset.pattern.permute.xlu0 1
    %149 = vperm.xlu0 %148, %v114
    %v150 = vpop.permute.xlu0 %149
    %151 = vset.pattern.permute.xlu0 1
    %152 = vperm.xlu0 %151, %v115
    %v153 = vpop.permute.xlu0 %152
    %154 = vset.pattern.permute.xlu0 1
    %155 = vperm.xlu0 %154, %v116
    %v156 = vpop.permute.xlu0 %155
    %157 = vset.pattern.permute.xlu0 1
    %158 = vperm.xlu0 %157, %v117
    %v159 = vpop.permute.xlu0 %158
    %160 = vset.pattern.permute.xlu0 1
    %161 = vperm.xlu0 %160, %v118
    %v162 = vpop.permute.xlu0 %161
    %163 = vset.pattern.permute.xlu0 1
    %164 = vperm.xlu0 %163, %v119
    %v165 = vpop.permute.xlu0 %164
    %166 = vset.pattern.permute.xlu0 1
    %167 = vperm.xlu0 %166, %v120
    %v168 = vpop.permute.xlu0 %167
    %v169 = vsel %vm112, %v123, %v147
    %v170 = vsel %vm112, %v126, %v150
    %v171 = vsel %vm112, %v129, %v153
    %v172 = vsel %vm112, %v132, %v156
    %v173 = vsel %vm112, %v135, %v159
    %v174 = vsel %vm112, %v138, %v162
    %v175 = vsel %vm112, %v141, %v165
    %v176 = vsel %vm112, %v144, %v168
    %vm177 = vcmp.eq.s32.totalorder %v111, %v169
    %vm178 = vcmp.eq.s32.totalorder %v111, %v170
    %vm179 = vcmp.eq.s32.totalorder %v111, %v171
    %vm180 = vcmp.eq.s32.totalorder %v111, %v172
    %vm181 = vcmp.eq.s32.totalorder %v111, %v173
    %vm182 = vcmp.eq.s32.totalorder %v111, %v174
    %vm183 = vcmp.eq.s32.totalorder %v111, %v175
    %vm184 = vcmp.eq.s32.totalorder %v111, %v176
    %v185 = vsel %vm177, 1, 0
    %v186 = vsel %vm178, 1, 0
    %v187 = vsel %vm179, 1, 0
    %v188 = vsel %vm180, 1, 0
    %v189 = vsel %vm181, 1, 0
    %v190 = vsel %vm182, 1, 0
    %v191 = vsel %vm183, 1, 0
    %v192 = vsel %vm184, 1, 0
    %v193 = vcvt.s32.f32 %v185
    %v194 = vcvt.s32.f32 %v186
    %v195 = vcvt.s32.f32 %v187
    %v196 = vcvt.s32.f32 %v188
    %v197 = vcvt.s32.f32 %v189
    %v198 = vcvt.s32.f32 %v190
    %v199 = vcvt.s32.f32 %v191
    %v200 = vcvt.s32.f32 %v192
    %v201 = vld [vmem:[#allocation2] sm:$0xff]
    %v202 = vld [vmem:[#allocation2 + $0x8] sm:$0xff]
    %vm203 = vcmask 130048
    %v205 = vsel %vm203, %v193, 0
    %v208 = vsel %vm203, %v194, 0
    %v211 = vsel %vm203, %v195, 0
    %v214 = vsel %vm203, %v196, 0
    %v217 = vsel %vm203, %v197, 0
    %v220 = vsel %vm203, %v198, 0
    %v223 = vsel %vm203, %v199, 0
    %v226 = vsel %vm203, %v200, 0
    %228 = vmatprep.subr.mxu0 0.0
    %229 = vmatpush1.msra.mxu0 %v201
    %230 = vmatprep.subr.mxu0 0.0
    %231 = vmatpush1.msra.mxu0 %v202
    %232 = vmatprep.subr.mxu0 0.0
    %233 = vmatpush1.msra.mxu0 0.0
    %234 = vmatprep.subr.mxu0 0.0
    %235 = vmatpush1.msra.mxu0 0.0
    %236 = vmatprep.subr.mxu0 0.0
    %237 = vmatpush1.msra.mxu0 0.0
    %238 = vmatprep.subr.mxu0 0.0
    %239 = vmatpush1.msra.mxu0 0.0
    %240 = vmatprep.subr.mxu0 0.0
    %241 = vmatpush1.msra.mxu0 0.0
    %242 = vmatprep.subr.mxu0 0.0
    %243 = vmatpush1.msra.mxu0 0.0
    %244 = vmatprep.subr.mxu0 0.0
    %245 = vmatpush1.msra.mxu0 0.0
    %246 = vmatprep.subr.mxu0 0.0
    %247 = vmatpush1.msra.mxu0 0.0
    %248 = vmatprep.subr.mxu0 0.0
    %249 = vmatpush1.msra.mxu0 0.0
    %250 = vmatprep.subr.mxu0 0.0
    %251 = vmatpush1.msra.mxu0 0.0
    %252 = vmatprep.subr.mxu0 0.0
    %253 = vmatpush1.msra.mxu0 0.0
    %254 = vmatprep.subr.mxu0 0.0
    %255 = vmatpush1.msra.mxu0 0.0
    %256 = vmatprep.subr.mxu0 0.0
    %257 = vmatpush1.msra.mxu0 0.0
    %258 = vmatprep.subr.mxu0 0.0
    %259 = vmatpush1.msra.mxu0 0.0
    %260 = vmatprep.subr.mxu0 0.0
    %261 = vmatpush1.msra.mxu0 0.0
    %262 = vmatprep.subr.mxu0 0.0
    %263 = vmatpush1.msra.mxu0 0.0
    %264 = vmatprep.subr.mxu0 0.0
    %265 = vmatpush1.msra.mxu0 0.0
    %266 = vmatprep.subr.mxu0 0.0
    %267 = vmatpush1.msra.mxu0 0.0
    %268 = vmatprep.subr.mxu0 0.0
    %269 = vmatpush1.msra.mxu0 0.0
    %270 = vmatprep.subr.mxu0 0.0
    %271 = vmatpush1.msra.mxu0 0.0
    %272 = vmatprep.subr.mxu0 0.0
    %273 = vmatpush1.msra.mxu0 0.0
    %274 = vmatprep.subr.mxu0 0.0
    %275 = vmatpush1.msra.mxu0 0.0
    %276 = vmatprep.subr.mxu0 0.0
    %277 = vmatpush1.msra.mxu0 0.0
    %278 = vmatprep.subr.mxu0 0.0
    %279 = vmatpush1.msra.mxu0 0.0
    %280 = vmatprep.subr.mxu0 0.0
    %281 = vmatpush1.msra.mxu0 0.0
    %282 = vmatprep.subr.mxu0 0.0
    %283 = vmatpush1.msra.mxu0 0.0
    %284 = vmatprep.subr.mxu0 0.0
    %285 = vmatpush1.msra.mxu0 0.0
    %286 = vmatprep.subr.mxu0 0.0
    %287 = vmatpush1.msra.mxu0 0.0
    %288 = vmatprep.subr.mxu0 0.0
    %289 = vmatpush1.msra.mxu0 0.0
    %290 = vmatprep.subr.mxu0 0.0
    %291 = vmatpush1.msra.mxu0 0.0
    %292 = vmatprep.mubr.f32.mxu0 0.0
    %293 = vmatmul.mubr.f32.gmra.mrb[0].mxu0 %v205
    %v294 = vpop.f32.mrb[0].mxu0
    %v295 = vadd.f32 0.0, %v294
    %v296 = vpop.f32.mrb[0].mxu0
    %297 = vmatprep.mubr.f32.mxu0 0.0
    %298 = vmatmul.mubr.f32.gmra.mrb[0].mxu0 %v208
    %v299 = vpop.f32.mrb[0].mxu0
    %v300 = vadd.f32 0.0, %v299
    %v301 = vpop.f32.mrb[0].mxu0
    %302 = vmatprep.mubr.f32.mxu0 0.0
    %303 = vmatmul.mubr.f32.gmra.mrb[0].mxu0 %v211
    %v304 = vpop.f32.mrb[0].mxu0
    %v305 = vadd.f32 0.0, %v304
    %v306 = vpop.f32.mrb[0].mxu0
    %307 = vmatprep.mubr.f32.mxu0 0.0
    %308 = vmatmul.mubr.f32.gmra.mrb[0].mxu0 %v214
    %v309 = vpop.f32.mrb[0].mxu0
    %v310 = vadd.f32 0.0, %v309
    %v311 = vpop.f32.mrb[0].mxu0
    %312 = vmatprep.mubr.f32.mxu0 0.0
    %313 = vmatmul.mubr.f32.gmra.mrb[0].mxu0 %v217
    %v314 = vpop.f32.mrb[0].mxu0
    %v315 = vadd.f32 0.0, %v314
    %v316 = vpop.f32.mrb[0].mxu0
    %317 = vmatprep.mubr.f32.mxu0 0.0
    %318 = vmatmul.mubr.f32.gmra.mrb[0].mxu0 %v220
    %v319 = vpop.f32.mrb[0].mxu0
    %v320 = vadd.f32 0.0, %v319
    %v321 = vpop.f32.mrb[0].mxu0
    %322 = vmatprep.mubr.f32.mxu0 0.0
    %323 = vmatmul.mubr.f32.gmra.mrb[0].mxu0 %v223
    %v324 = vpop.f32.mrb[0].mxu0
    %v325 = vadd.f32 0.0, %v324
    %v326 = vpop.f32.mrb[0].mxu0
    %327 = vmatprep.mubr.f32.mxu0 0.0
    %328 = vmatmul.mubr.f32.gmra.mrb[0].mxu0 %v226
    %v329 = vpop.f32.mrb[0].mxu0
    %v330 = vadd.f32 0.0, %v329
    %v331 = vpop.f32.mrb[0].mxu0
    %332 = vdwg.mxu0
    %v333 = vld [vmem:[#allocation4] sm:$0xff]
    %v334 = vld [vmem:[#allocation4 + $0x8] sm:$0xff]
    %v335 = vld [vmem:[#allocation4 + $0x10] sm:$0xff]
    %v336 = vld [vmem:[#allocation4 + $0x18] sm:$0xff]
    %vm337 = vcmask 261120
    %v339 = vsel %vm337, 0.0, 0
    %341 = vmatprep.subr.mxu0 0.0
    %342 = vmatpush1.msra.mxu0 %v333
    %343 = vmatprep.subr.mxu0 0.0
    %344 = vmatpush1.msra.mxu0 %v334
    %345 = vmatprep.subr.mxu0 0.0
    %346 = vmatpush1.msra.mxu0 %v335
    %347 = vmatprep.subr.mxu0 0.0
    %348 = vmatpush1.msra.mxu0 %v336
    %349 = vmatprep.subr.mxu0 0.0
    %350 = vmatpush1.msra.mxu0 0.0
    %351 = vmatprep.subr.mxu0 0.0
    %352 = vmatpush1.msra.mxu0 0.0
    %353 = vmatprep.subr.mxu0 0.0
    %354 = vmatpush1.msra.mxu0 0.0
    %355 = vmatprep.subr.mxu0 0.0
    %356 = vmatpush1.msra.mxu0 0.0
    %357 = vmatprep.subr.mxu0 0.0
    %358 = vmatpush1.msra.mxu0 0.0
    %359 = vmatprep.subr.mxu0 0.0
    %360 = vmatpush1.msra.mxu0 0.0
    %361 = vmatprep.subr.mxu0 0.0
    %362 = vmatpush1.msra.mxu0 0.0
    %363 = vmatprep.subr.mxu0 0.0
    %364 = vmatpush1.msra.mxu0 0.0
    %365 = vmatprep.subr.mxu0 0.0
    %366 = vmatpush1.msra.mxu0 0.0
    %367 = vmatprep.subr.mxu0 0.0
    %368 = vmatpush1.msra.mxu0 0.0
    %369 = vmatprep.subr.mxu0 0.0
    %370 = vmatpush1.msra.mxu0 0.0
    %371 = vmatprep.subr.mxu0 0.0
    %372 = vmatpush1.msra.mxu0 0.0
    %373 = vmatprep.subr.mxu0 0.0
    %374 = vmatpush1.msra.mxu0 0.0
    %375 = vmatprep.subr.mxu0 0.0
    %376 = vmatpush1.msra.mxu0 0.0
    %377 = vmatprep.subr.mxu0 0.0
    %378 = vmatpush1.msra.mxu0 0.0
    %379 = vmatprep.subr.mxu0 0.0
    %380 = vmatpush1.msra.mxu0 0.0
    %381 = vmatprep.subr.mxu0 0.0
    %382 = vmatpush1.msra.mxu0 0.0
    %383 = vmatprep.subr.mxu0 0.0
    %384 = vmatpush1.msra.mxu0 0.0
    %385 = vmatprep.subr.mxu0 0.0
    %386 = vmatpush1.msra.mxu0 0.0
    %387 = vmatprep.subr.mxu0 0.0
    %388 = vmatpush1.msra.mxu0 0.0
    %389 = vmatprep.subr.mxu0 0.0
    %390 = vmatpush1.msra.mxu0 0.0
    %391 = vmatprep.subr.mxu0 0.0
    %392 = vmatpush1.msra.mxu0 0.0
    %393 = vmatprep.subr.mxu0 0.0
    %394 = vmatpush1.msra.mxu0 0.0
    %395 = vmatprep.subr.mxu0 0.0
    %396 = vmatpush1.msra.mxu0 0.0
    %397 = vmatprep.subr.mxu0 0.0
    %398 = vmatpush1.msra.mxu0 0.0
    %399 = vmatprep.subr.mxu0 0.0
    %400 = vmatpush1.msra.mxu0 0.0
    %401 = vmatprep.subr.mxu0 0.0
    %402 = vmatpush1.msra.mxu0 0.0
    %403 = vmatprep.subr.mxu0 0.0
    %404 = vmatpush1.msra.mxu0 0.0
    %405 = vmatprep.mubr.f32.mxu0 0.0
    %406 = vmatmul.mubr.f32.gmra.mrb[0].mxu0 %v339
    %v407 = vpop.f32.mrb[0].mxu0
    %v408 = vadd.f32 0.0, %v407
    %v409 = vpop.f32.mrb[0].mxu0
    %410 = vdwg.mxu0
    %v411 = vadd.f32 %v295, %v408
    %v412 = vxor.u32 %v411, 2147483648
    %v413 = vmul.f32 %v412, 1.442695
    %v414 = vpow.pop %v413
    %v415 = vadd.f32 %v414, 1.0
    %v416 = vrcp.pop %v415
    %v417 = vmul.f32 1.0, %v416
    %v418 = vtanh.pop %v411
    %v419 = vmul.f32 %v417, 0.0
    %421 = vrot.lane.b32.xlu0 %v418, 64
    %v422 = vpop.permute.xlu0 %421
    %v424 = vmul.f32 %v417, %v422
    %426 = vrot.lane.b32.xlu0 %v424, 32
    %v427 = vpop.permute.xlu0 %426
    %v429 = vadd.f32 %v419, %v427
    %v430 = vtanh.pop %v429
    %432 = vrot.lane.b32.xlu0 %v430, 64
    %v433 = vpop.permute.xlu0 %432
    %v435 = vmul.f32 %v417, %v433
    %437 = vrot.lane.b32.xlu0 %v435, 32
    %v438 = vpop.permute.xlu0 %437
    %v439 = vsel %vm337, %v438, 0
    %441 = vmatprep.subr.mxu0 0.0
    %442 = vmatpush1.msra.mxu0 %v333
    %443 = vmatprep.subr.mxu0 0.0
    %444 = vmatpush1.msra.mxu0 %v334
    %445 = vmatprep.subr.mxu0 0.0
    %446 = vmatpush1.msra.mxu0 %v335
    %447 = vmatprep.subr.mxu0 0.0
    %448 = vmatpush1.msra.mxu0 %v336
    %449 = vmatprep.subr.mxu0 0.0
    %450 = vmatpush1.msra.mxu0 0.0
    %451 = vmatprep.subr.mxu0 0.0
    %452 = vmatpush1.msra.mxu0 0.0
    %453 = vmatprep.subr.mxu0 0.0
    %454 = vmatpush1.msra.mxu0 0.0
    %455 = vmatprep.subr.mxu0 0.0
    %456 = vmatpush1.msra.mxu0 0.0
    %457 = vmatprep.subr.mxu0 0.0
    %458 = vmatpush1.msra.mxu0 0.0
    %459 = vmatprep.subr.mxu0 0.0
    %460 = vmatpush1.msra.mxu0 0.0
    %461 = vmatprep.subr.mxu0 0.0
    %462 = vmatpush1.msra.mxu0 0.0
    %463 = vmatprep.subr.mxu0 0.0
    %464 = vmatpush1.msra.mxu0 0.0
    %465 = vmatprep.subr.mxu0 0.0
    %466 = vmatpush1.msra.mxu0 0.0
    %467 = vmatprep.subr.mxu0 0.0
    %468 = vmatpush1.msra.mxu0 0.0
    %469 = vmatprep.subr.mxu0 0.0
    %470 = vmatpush1.msra.mxu0 0.0
    %471 = vmatprep.subr.mxu0 0.0
    %472 = vmatpush1.msra.mxu0 0.0
    %473 = vmatprep.subr.mxu0 0.0
    %474 = vmatpush1.msra.mxu0 0.0
    %475 = vmatprep.subr.mxu0 0.0
    %476 = vmatpush1.msra.mxu0 0.0
    %477 = vmatprep.subr.mxu0 0.0
    %478 = vmatpush1.msra.mxu0 0.0
    %479 = vmatprep.subr.mxu0 0.0
    %480 = vmatpush1.msra.mxu0 0.0
    %481 = vmatprep.subr.mxu0 0.0
    %482 = vmatpush1.msra.mxu0 0.0
    %483 = vmatprep.subr.mxu0 0.0
    %484 = vmatpush1.msra.mxu0 0.0
    %485 = vmatprep.subr.mxu0 0.0
    %486 = vmatpush1.msra.mxu0 0.0
    %487 = vmatprep.subr.mxu0 0.0
    %488 = vmatpush1.msra.mxu0 0.0
    %489 = vmatprep.subr.mxu0 0.0
    %490 = vmatpush1.msra.mxu0 0.0
    %491 = vmatprep.subr.mxu0 0.0
    %492 = vmatpush1.msra.mxu0 0.0
    %493 = vmatprep.subr.mxu0 0.0
    %494 = vmatpush1.msra.mxu0 0.0
    %495 = vmatprep.subr.mxu0 0.0
    %496 = vmatpush1.msra.mxu0 0.0
    %497 = vmatprep.subr.mxu0 0.0
    %498 = vmatpush1.msra.mxu0 0.0
    %499 = vmatprep.subr.mxu0 0.0
    %500 = vmatpush1.msra.mxu0 0.0
    %501 = vmatprep.subr.mxu0 0.0
    %502 = vmatpush1.msra.mxu0 0.0
    %503 = vmatprep.subr.mxu0 0.0
    %504 = vmatpush1.msra.mxu0 0.0
    %505 = vmatprep.mubr.f32.mxu0 0.0
    %506 = vmatmul.mubr.f32.gmra.mrb[0].mxu0 %v439
    %v507 = vpop.f32.mrb[0].mxu0
    %v508 = vadd.f32 0.0, %v507
    %v509 = vpop.f32.mrb[0].mxu0
    %510 = vdwg.mxu0
    %v511 = vadd.f32 %v300, %v508
    %v512 = vxor.u32 %v511, 2147483648
    %v513 = vmul.f32 %v512, 1.442695
    %v514 = vpow.pop %v513
    %v515 = vadd.f32 %v514, 1.0
    %v516 = vrcp.pop %v515
    %v517 = vmul.f32 1.0, %v516
    %v518 = vtanh.pop %v511
    %v519 = vmul.f32 %v517, %v429
    %521 = vrot.lane.b32.xlu0 %v518, 64
    %v522 = vpop.permute.xlu0 %521
    %v524 = vmul.f32 %v517, %v522
    %526 = vrot.lane.b32.xlu0 %v524, 32
    %v527 = vpop.permute.xlu0 %526
    %v529 = vadd.f32 %v519, %v527
    %v530 = vtanh.pop %v529
    %532 = vrot.lane.b32.xlu0 %v530, 64
    %v533 = vpop.permute.xlu0 %532
    %v535 = vmul.f32 %v517, %v533
    %537 = vrot.lane.b32.xlu0 %v535, 32
    %v538 = vpop.permute.xlu0 %537
    %v539 = vsel %vm337, %v538, 0
    %541 = vmatprep.subr.mxu0 0.0
    %542 = vmatpush1.msra.mxu0 %v333
    %543 = vmatprep.subr.mxu0 0.0
    %544 = vmatpush1.msra.mxu0 %v334
    %545 = vmatprep.subr.mxu0 0.0
    %546 = vmatpush1.msra.mxu0 %v335
    %547 = vmatprep.subr.mxu0 0.0
    %548 = vmatpush1.msra.mxu0 %v336
    %549 = vmatprep.subr.mxu0 0.0
    %550 = vmatpush1.msra.mxu0 0.0
    %551 = vmatprep.subr.mxu0 0.0
    %552 = vmatpush1.msra.mxu0 0.0
    %553 = vmatprep.subr.mxu0 0.0
    %554 = vmatpush1.msra.mxu0 0.0
    %555 = vmatprep.subr.mxu0 0.0
    %556 = vmatpush1.msra.mxu0 0.0
    %557 = vmatprep.subr.mxu0 0.0
    %558 = vmatpush1.msra.mxu0 0.0
    %559 = vmatprep.subr.mxu0 0.0
    %560 = vmatpush1.msra.mxu0 0.0
    %561 = vmatprep.subr.mxu0 0.0
    %562 = vmatpush1.msra.mxu0 0.0
    %563 = vmatprep.subr.mxu0 0.0
    %564 = vmatpush1.msra.mxu0 0.0
    %565 = vmatprep.subr.mxu0 0.0
    %566 = vmatpush1.msra.mxu0 0.0
    %567 = vmatprep.subr.mxu0 0.0
    %568 = vmatpush1.msra.mxu0 0.0
    %569 = vmatprep.subr.mxu0 0.0
    %570 = vmatpush1.msra.mxu0 0.0
    %571 = vmatprep.subr.mxu0 0.0
    %572 = vmatpush1.msra.mxu0 0.0
    %573 = vmatprep.subr.mxu0 0.0
    %574 = vmatpush1.msra.mxu0 0.0
    %575 = vmatprep.subr.mxu0 0.0
    %576 = vmatpush1.msra.mxu0 0.0
    %577 = vmatprep.subr.mxu0 0.0
    %578 = vmatpush1.msra.mxu0 0.0
    %579 = vmatprep.subr.mxu0 0.0
    %580 = vmatpush1.msra.mxu0 0.0
    %581 = vmatprep.subr.mxu0 0.0
    %582 = vmatpush1.msra.mxu0 0.0
    %583 = vmatprep.subr.mxu0 0.0
    %584 = vmatpush1.msra.mxu0 0.0
    %585 = vmatprep.subr.mxu0 0.0
    %586 = vmatpush1.msra.mxu0 0.0
    %587 = vmatprep.subr.mxu0 0.0
    %588 = vmatpush1.msra.mxu0 0.0
    %589 = vmatprep.subr.mxu0 0.0
    %590 = vmatpush1.msra.mxu0 0.0
    %591 = vmatprep.subr.mxu0 0.0
    %592 = vmatpush1.msra.mxu0 0.0
    %593 = vmatprep.subr.mxu0 0.0
    %594 = vmatpush1.msra.mxu0 0.0
    %595 = vmatprep.subr.mxu0 0.0
    %596 = vmatpush1.msra.mxu0 0.0
    %597 = vmatprep.subr.mxu0 0.0
    %598 = vmatpush1.msra.mxu0 0.0
    %599 = vmatprep.subr.mxu0 0.0
    %600 = vmatpush1.msra.mxu0 0.0
    %601 = vmatprep.subr.mxu0 0.0
    %602 = vmatpush1.msra.mxu0 0.0
    %603 = vmatprep.subr.mxu0 0.0
    %604 = vmatpush1.msra.mxu0 0.0
    %605 = vmatprep.mubr.f32.mxu0 0.0
    %606 = vmatmul.mubr.f32.gmra.mrb[0].mxu0 %v539
    %v607 = vpop.f32.mrb[0].mxu0
    %v608 = vadd.f32 0.0, %v607
    %v609 = vpop.f32.mrb[0].mxu0
    %610 = vdwg.mxu0
    %v611 = vadd.f32 %v305, %v608
    %v612 = vxor.u32 %v611, 2147483648
    %v613 = vmul.f32 %v612, 1.442695
    %v614 = vpow.pop %v613
    %v615 = vadd.f32 %v614, 1.0
    %v616 = vrcp.pop %v615
    %v617 = vmul.f32 1.0, %v616
    %v618 = vtanh.pop %v611
    %v619 = vmul.f32 %v617, %v529
    %621 = vrot.lane.b32.xlu0 %v618, 64
    %v622 = vpop.permute.xlu0 %621
    %v624 = vmul.f32 %v617, %v622
    %626 = vrot.lane.b32.xlu0 %v624, 32
    %v627 = vpop.permute.xlu0 %626
    %v629 = vadd.f32 %v619, %v627
    %v630 = vtanh.pop %v629
    %632 = vrot.lane.b32.xlu0 %v630, 64
    %v633 = vpop.permute.xlu0 %632
    %v635 = vmul.f32 %v617, %v633
    %637 = vrot.lane.b32.xlu0 %v635, 32
    %v638 = vpop.permute.xlu0 %637
    %v639 = vsel %vm337, %v638, 0
    %641 = vmatprep.subr.mxu0 0.0
    %642 = vmatpush1.msra.mxu0 %v333
    %643 = vmatprep.subr.mxu0 0.0
    %644 = vmatpush1.msra.mxu0 %v334
    %645 = vmatprep.subr.mxu0 0.0
    %646 = vmatpush1.msra.mxu0 %v335
    %647 = vmatprep.subr.mxu0 0.0
    %648 = vmatpush1.msra.mxu0 %v336
    %649 = vmatprep.subr.mxu0 0.0
    %650 = vmatpush1.msra.mxu0 0.0
    %651 = vmatprep.subr.mxu0 0.0
    %652 = vmatpush1.msra.mxu0 0.0
    %653 = vmatprep.subr.mxu0 0.0
    %654 = vmatpush1.msra.mxu0 0.0
    %655 = vmatprep.subr.mxu0 0.0
    %656 = vmatpush1.msra.mxu0 0.0
    %657 = vmatprep.subr.mxu0 0.0
    %658 = vmatpush1.msra.mxu0 0.0
    %659 = vmatprep.subr.mxu0 0.0
    %660 = vmatpush1.msra.mxu0 0.0
    %661 = vmatprep.subr.mxu0 0.0
    %662 = vmatpush1.msra.mxu0 0.0
    %663 = vmatprep.subr.mxu0 0.0
    %664 = vmatpush1.msra.mxu0 0.0
    %665 = vmatprep.subr.mxu0 0.0
    %666 = vmatpush1.msra.mxu0 0.0
    %667 = vmatprep.subr.mxu0 0.0
    %668 = vmatpush1.msra.mxu0 0.0
    %669 = vmatprep.subr.mxu0 0.0
    %670 = vmatpush1.msra.mxu0 0.0
    %671 = vmatprep.subr.mxu0 0.0
    %672 = vmatpush1.msra.mxu0 0.0
    %673 = vmatprep.subr.mxu0 0.0
    %674 = vmatpush1.msra.mxu0 0.0
    %675 = vmatprep.subr.mxu0 0.0
    %676 = vmatpush1.msra.mxu0 0.0
    %677 = vmatprep.subr.mxu0 0.0
    %678 = vmatpush1.msra.mxu0 0.0
    %679 = vmatprep.subr.mxu0 0.0
    %680 = vmatpush1.msra.mxu0 0.0
    %681 = vmatprep.subr.mxu0 0.0
    %682 = vmatpush1.msra.mxu0 0.0
    %683 = vmatprep.subr.mxu0 0.0
    %684 = vmatpush1.msra.mxu0 0.0
    %685 = vmatprep.subr.mxu0 0.0
    %686 = vmatpush1.msra.mxu0 0.0
    %687 = vmatprep.subr.mxu0 0.0
    %688 = vmatpush1.msra.mxu0 0.0
    %689 = vmatprep.subr.mxu0 0.0
    %690 = vmatpush1.msra.mxu0 0.0
    %691 = vmatprep.subr.mxu0 0.0
    %692 = vmatpush1.msra.mxu0 0.0
    %693 = vmatprep.subr.mxu0 0.0
    %694 = vmatpush1.msra.mxu0 0.0
    %695 = vmatprep.subr.mxu0 0.0
    %696 = vmatpush1.msra.mxu0 0.0
    %697 = vmatprep.subr.mxu0 0.0
    %698 = vmatpush1.msra.mxu0 0.0
    %699 = vmatprep.subr.mxu0 0.0
    %700 = vmatpush1.msra.mxu0 0.0
    %701 = vmatprep.subr.mxu0 0.0
    %702 = vmatpush1.msra.mxu0 0.0
    %703 = vmatprep.subr.mxu0 0.0
    %704 = vmatpush1.msra.mxu0 0.0
    %705 = vmatprep.mubr.f32.mxu0 0.0
    %706 = vmatmul.mubr.f32.gmra.mrb[0].mxu0 %v639
    %v707 = vpop.f32.mrb[0].mxu0
    %v708 = vadd.f32 0.0, %v707
    %v709 = vpop.f32.mrb[0].mxu0
    %710 = vdwg.mxu0
    %v711 = vadd.f32 %v310, %v708
    %v712 = vxor.u32 %v711, 2147483648
    %v713 = vmul.f32 %v712, 1.442695
    %v714 = vpow.pop %v713
    %v715 = vadd.f32 %v714, 1.0
    %v716 = vrcp.pop %v715
    %v717 = vmul.f32 1.0, %v716
    %v718 = vtanh.pop %v711
    %v719 = vmul.f32 %v717, %v629
    %721 = vrot.lane.b32.xlu0 %v718, 64
    %v722 = vpop.permute.xlu0 %721
    %v724 = vmul.f32 %v717, %v722
    %726 = vrot.lane.b32.xlu0 %v724, 32
    %v727 = vpop.permute.xlu0 %726
    %v729 = vadd.f32 %v719, %v727
    %v730 = vtanh.pop %v729
    %732 = vrot.lane.b32.xlu0 %v730, 64
    %v733 = vpop.permute.xlu0 %732
    %v735 = vmul.f32 %v717, %v733
    %737 = vrot.lane.b32.xlu0 %v735, 32
    %v738 = vpop.permute.xlu0 %737
    %v739 = vsel %vm337, %v738, 0
    %741 = vmatprep.subr.mxu0 0.0
    %742 = vmatpush1.msra.mxu0 %v333
    %743 = vmatprep.subr.mxu0 0.0
    %744 = vmatpush1.msra.mxu0 %v334
    %745 = vmatprep.subr.mxu0 0.0
    %746 = vmatpush1.msra.mxu0 %v335
    %747 = vmatprep.subr.mxu0 0.0
    %748 = vmatpush1.msra.mxu0 %v336
    %749 = vmatprep.subr.mxu0 0.0
    %750 = vmatpush1.msra.mxu0 0.0
    %751 = vmatprep.subr.mxu0 0.0
    %752 = vmatpush1.msra.mxu0 0.0
    %753 = vmatprep.subr.mxu0 0.0
    %754 = vmatpush1.msra.mxu0 0.0
    %755 = vmatprep.subr.mxu0 0.0
    %756 = vmatpush1.msra.mxu0 0.0
    %757 = vmatprep.subr.mxu0 0.0
    %758 = vmatpush1.msra.mxu0 0.0
    %759 = vmatprep.subr.mxu0 0.0
    %760 = vmatpush1.msra.mxu0 0.0
    %761 = vmatprep.subr.mxu0 0.0
    %762 = vmatpush1.msra.mxu0 0.0
    %763 = vmatprep.subr.mxu0 0.0
    %764 = vmatpush1.msra.mxu0 0.0
    %765 = vmatprep.subr.mxu0 0.0
    %766 = vmatpush1.msra.mxu0 0.0
    %767 = vmatprep.subr.mxu0 0.0
    %768 = vmatpush1.msra.mxu0 0.0
    %769 = vmatprep.subr.mxu0 0.0
    %770 = vmatpush1.msra.mxu0 0.0
    %771 = vmatprep.subr.mxu0 0.0
    %772 = vmatpush1.msra.mxu0 0.0
    %773 = vmatprep.subr.mxu0 0.0
    %774 = vmatpush1.msra.mxu0 0.0
    %775 = vmatprep.subr.mxu0 0.0
    %776 = vmatpush1.msra.mxu0 0.0
    %777 = vmatprep.subr.mxu0 0.0
    %778 = vmatpush1.msra.mxu0 0.0
    %779 = vmatprep.subr.mxu0 0.0
    %780 = vmatpush1.msra.mxu0 0.0
    %781 = vmatprep.subr.mxu0 0.0
    %782 = vmatpush1.msra.mxu0 0.0
    %783 = vmatprep.subr.mxu0 0.0
    %784 = vmatpush1.msra.mxu0 0.0
    %785 = vmatprep.subr.mxu0 0.0
    %786 = vmatpush1.msra.mxu0 0.0
    %787 = vmatprep.subr.mxu0 0.0
    %788 = vmatpush1.msra.mxu0 0.0
    %789 = vmatprep.subr.mxu0 0.0
    %790 = vmatpush1.msra.mxu0 0.0
    %791 = vmatprep.subr.mxu0 0.0
    %792 = vmatpush1.msra.mxu0 0.0
    %793 = vmatprep.subr.mxu0 0.0
    %794 = vmatpush1.msra.mxu0 0.0
    %795 = vmatprep.subr.mxu0 0.0
    %796 = vmatpush1.msra.mxu0 0.0
    %797 = vmatprep.subr.mxu0 0.0
    %798 = vmatpush1.msra.mxu0 0.0
    %799 = vmatprep.subr.mxu0 0.0
    %800 = vmatpush1.msra.mxu0 0.0
    %801 = vmatprep.subr.mxu0 0.0
    %802 = vmatpush1.msra.mxu0 0.0
    %803 = vmatprep.subr.mxu0 0.0
    %804 = vmatpush1.msra.mxu0 0.0
    %805 = vmatprep.mubr.f32.mxu0 0.0
    %806 = vmatmul.mubr.f32.gmra.mrb[0].mxu0 %v739
    %v807 = vpop.f32.mrb[0].mxu0
    %v808 = vadd.f32 0.0, %v807
    %v809 = vpop.f32.mrb[0].mxu0
    %810 = vdwg.mxu0
    %v811 = vadd.f32 %v315, %v808
    %v812 = vxor.u32 %v811, 2147483648
    %v813 = vmul.f32 %v812, 1.442695
    %v814 = vpow.pop %v813
    %v815 = vadd.f32 %v814, 1.0
    %v816 = vrcp.pop %v815
    %v817 = vmul.f32 1.0, %v816
    %v818 = vtanh.pop %v811
    %v819 = vmul.f32 %v817, %v729
    %821 = vrot.lane.b32.xlu0 %v818, 64
    %v822 = vpop.permute.xlu0 %821
    %v824 = vmul.f32 %v817, %v822
    %826 = vrot.lane.b32.xlu0 %v824, 32
    %v827 = vpop.permute.xlu0 %826
    %v829 = vadd.f32 %v819, %v827
    %v830 = vtanh.pop %v829
    %832 = vrot.lane.b32.xlu0 %v830, 64
    %v833 = vpop.permute.xlu0 %832
    %v835 = vmul.f32 %v817, %v833
    %837 = vrot.lane.b32.xlu0 %v835, 32
    %v838 = vpop.permute.xlu0 %837
    %v839 = vsel %vm337, %v838, 0
    %841 = vmatprep.subr.mxu0 0.0
    %842 = vmatpush1.msra.mxu0 %v333
    %843 = vmatprep.subr.mxu0 0.0
    %844 = vmatpush1.msra.mxu0 %v334
    %845 = vmatprep.subr.mxu0 0.0
    %846 = vmatpush1.msra.mxu0 %v335
    %847 = vmatprep.subr.mxu0 0.0
    %848 = vmatpush1.msra.mxu0 %v336
    %849 = vmatprep.subr.mxu0 0.0
    %850 = vmatpush1.msra.mxu0 0.0
    %851 = vmatprep.subr.mxu0 0.0
    %852 = vmatpush1.msra.mxu0 0.0
    %853 = vmatprep.subr.mxu0 0.0
    %854 = vmatpush1.msra.mxu0 0.0
    %855 = vmatprep.subr.mxu0 0.0
    %856 = vmatpush1.msra.mxu0 0.0
    %857 = vmatprep.subr.mxu0 0.0
    %858 = vmatpush1.msra.mxu0 0.0
    %859 = vmatprep.subr.mxu0 0.0
    %860 = vmatpush1.msra.mxu0 0.0
    %861 = vmatprep.subr.mxu0 0.0
    %862 = vmatpush1.msra.mxu0 0.0
    %863 = vmatprep.subr.mxu0 0.0
    %864 = vmatpush1.msra.mxu0 0.0
    %865 = vmatprep.subr.mxu0 0.0
    %866 = vmatpush1.msra.mxu0 0.0
    %867 = vmatprep.subr.mxu0 0.0
    %868 = vmatpush1.msra.mxu0 0.0
    %869 = vmatprep.subr.mxu0 0.0
    %870 = vmatpush1.msra.mxu0 0.0
    %871 = vmatprep.subr.mxu0 0.0
    %872 = vmatpush1.msra.mxu0 0.0
    %873 = vmatprep.subr.mxu0 0.0
    %874 = vmatpush1.msra.mxu0 0.0
    %875 = vmatprep.subr.mxu0 0.0
    %876 = vmatpush1.msra.mxu0 0.0
    %877 = vmatprep.subr.mxu0 0.0
    %878 = vmatpush1.msra.mxu0 0.0
    %879 = vmatprep.subr.mxu0 0.0
    %880 = vmatpush1.msra.mxu0 0.0
    %881 = vmatprep.subr.mxu0 0.0
    %882 = vmatpush1.msra.mxu0 0.0
    %883 = vmatprep.subr.mxu0 0.0
    %884 = vmatpush1.msra.mxu0 0.0
    %885 = vmatprep.subr.mxu0 0.0
    %886 = vmatpush1.msra.mxu0 0.0
    %887 = vmatprep.subr.mxu0 0.0
    %888 = vmatpush1.msra.mxu0 0.0
    %889 = vmatprep.subr.mxu0 0.0
    %890 = vmatpush1.msra.mxu0 0.0
    %891 = vmatprep.subr.mxu0 0.0
    %892 = vmatpush1.msra.mxu0 0.0
    %893 = vmatprep.subr.mxu0 0.0
    %894 = vmatpush1.msra.mxu0 0.0
    %895 = vmatprep.subr.mxu0 0.0
    %896 = vmatpush1.msra.mxu0 0.0
    %897 = vmatprep.subr.mxu0 0.0
    %898 = vmatpush1.msra.mxu0 0.0
    %899 = vmatprep.subr.mxu0 0.0
    %900 = vmatpush1.msra.mxu0 0.0
    %901 = vmatprep.subr.mxu0 0.0
    %902 = vmatpush1.msra.mxu0 0.0
    %903 = vmatprep.subr.mxu0 0.0
    %904 = vmatpush1.msra.mxu0 0.0
    %905 = vmatprep.mubr.f32.mxu0 0.0
    %906 = vmatmul.mubr.f32.gmra.mrb[0].mxu0 %v839
    %v907 = vpop.f32.mrb[0].mxu0
    %v908 = vadd.f32 0.0, %v907
    %v909 = vpop.f32.mrb[0].mxu0
    %910 = vdwg.mxu0
    %v911 = vadd.f32 %v320, %v908
    %v912 = vxor.u32 %v911, 2147483648
    %v913 = vmul.f32 %v912, 1.442695
    %v914 = vpow.pop %v913
    %v915 = vadd.f32 %v914, 1.0
    %v916 = vrcp.pop %v915
    %v917 = vmul.f32 1.0, %v916
    %v918 = vtanh.pop %v911
    %v919 = vmul.f32 %v917, %v829
    %921 = vrot.lane.b32.xlu0 %v918, 64
    %v922 = vpop.permute.xlu0 %921
    %v924 = vmul.f32 %v917, %v922
    %926 = vrot.lane.b32.xlu0 %v924, 32
    %v927 = vpop.permute.xlu0 %926
    %v929 = vadd.f32 %v919, %v927
    %v930 = vtanh.pop %v929
    %932 = vrot.lane.b32.xlu0 %v930, 64
    %v933 = vpop.permute.xlu0 %932
    %v935 = vmul.f32 %v917, %v933
    %937 = vrot.lane.b32.xlu0 %v935, 32
    %v938 = vpop.permute.xlu0 %937
    %v939 = vsel %vm337, %v938, 0
    %941 = vmatprep.subr.mxu0 0.0
    %942 = vmatpush1.msra.mxu0 %v333
    %943 = vmatprep.subr.mxu0 0.0
    %944 = vmatpush1.msra.mxu0 %v334
    %945 = vmatprep.subr.mxu0 0.0
    %946 = vmatpush1.msra.mxu0 %v335
    %947 = vmatprep.subr.mxu0 0.0
    %948 = vmatpush1.msra.mxu0 %v336
    %949 = vmatprep.subr.mxu0 0.0
    %950 = vmatpush1.msra.mxu0 0.0
    %951 = vmatprep.subr.mxu0 0.0
    %952 = vmatpush1.msra.mxu0 0.0
    %953 = vmatprep.subr.mxu0 0.0
    %954 = vmatpush1.msra.mxu0 0.0
    %955 = vmatprep.subr.mxu0 0.0
    %956 = vmatpush1.msra.mxu0 0.0
    %957 = vmatprep.subr.mxu0 0.0
    %958 = vmatpush1.msra.mxu0 0.0
    %959 = vmatprep.subr.mxu0 0.0
    %960 = vmatpush1.msra.mxu0 0.0
    %961 = vmatprep.subr.mxu0 0.0
    %962 = vmatpush1.msra.mxu0 0.0
    %963 = vmatprep.subr.mxu0 0.0
    %964 = vmatpush1.msra.mxu0 0.0
    %965 = vmatprep.subr.mxu0 0.0
    %966 = vmatpush1.msra.mxu0 0.0
    %967 = vmatprep.subr.mxu0 0.0
    %968 = vmatpush1.msra.mxu0 0.0
    %969 = vmatprep.subr.mxu0 0.0
    %970 = vmatpush1.msra.mxu0 0.0
    %971 = vmatprep.subr.mxu0 0.0
    %972 = vmatpush1.msra.mxu0 0.0
    %973 = vmatprep.subr.mxu0 0.0
    %974 = vmatpush1.msra.mxu0 0.0
    %975 = vmatprep.subr.mxu0 0.0
    %976 = vmatpush1.msra.mxu0 0.0
    %977 = vmatprep.subr.mxu0 0.0
    %978 = vmatpush1.msra.mxu0 0.0
    %979 = vmatprep.subr.mxu0 0.0
    %980 = vmatpush1.msra.mxu0 0.0
    %981 = vmatprep.subr.mxu0 0.0
    %982 = vmatpush1.msra.mxu0 0.0
    %983 = vmatprep.subr.mxu0 0.0
    %984 = vmatpush1.msra.mxu0 0.0
    %985 = vmatprep.subr.mxu0 0.0
    %986 = vmatpush1.msra.mxu0 0.0
    %987 = vmatprep.subr.mxu0 0.0
    %988 = vmatpush1.msra.mxu0 0.0
    %989 = vmatprep.subr.mxu0 0.0
    %990 = vmatpush1.msra.mxu0 0.0
    %991 = vmatprep.subr.mxu0 0.0
    %992 = vmatpush1.msra.mxu0 0.0
    %993 = vmatprep.subr.mxu0 0.0
    %994 = vmatpush1.msra.mxu0 0.0
    %995 = vmatprep.subr.mxu0 0.0
    %996 = vmatpush1.msra.mxu0 0.0
    %997 = vmatprep.subr.mxu0 0.0
    %998 = vmatpush1.msra.mxu0 0.0
    %999 = vmatprep.subr.mxu0 0.0
    %1000 = vmatpush1.msra.mxu0 0.0
    %1001 = vmatprep.subr.mxu0 0.0
    %1002 = vmatpush1.msra.mxu0 0.0
    %1003 = vmatprep.subr.mxu0 0.0
    %1004 = vmatpush1.msra.mxu0 0.0
    %1005 = vmatprep.mubr.f32.mxu0 0.0
    %1006 = vmatmul.mubr.f32.gmra.mrb[0].mxu0 %v939
    %v1007 = vpop.f32.mrb[0].mxu0
    %v1008 = vadd.f32 0.0, %v1007
    %v1009 = vpop.f32.mrb[0].mxu0
    %1010 = vdwg.mxu0
    %v1011 = vadd.f32 %v325, %v1008
    %v1012 = vxor.u32 %v1011, 2147483648
    %v1013 = vmul.f32 %v1012, 1.442695
    %v1014 = vpow.pop %v1013
    %v1015 = vadd.f32 %v1014, 1.0
    %v1016 = vrcp.pop %v1015
    %v1017 = vmul.f32 1.0, %v1016
    %v1018 = vtanh.pop %v1011
    %v1019 = vmul.f32 %v1017, %v929
    %1021 = vrot.lane.b32.xlu0 %v1018, 64
    %v1022 = vpop.permute.xlu0 %1021
    %v1024 = vmul.f32 %v1017, %v1022
    %1026 = vrot.lane.b32.xlu0 %v1024, 32
    %v1027 = vpop.permute.xlu0 %1026
    %v1029 = vadd.f32 %v1019, %v1027
    %v1030 = vtanh.pop %v1029
    %1032 = vrot.lane.b32.xlu0 %v1030, 64
    %v1033 = vpop.permute.xlu0 %1032
    %v1035 = vmul.f32 %v1017, %v1033
    %1037 = vrot.lane.b32.xlu0 %v1035, 32
    %v1038 = vpop.permute.xlu0 %1037
    %v1039 = vsel %vm337, %v1038, 0
    %1041 = vmatprep.subr.mxu0 0.0
    %1042 = vmatpush1.msra.mxu0 %v333
    %1043 = vmatprep.subr.mxu0 0.0
    %1044 = vmatpush1.msra.mxu0 %v334
    %1045 = vmatprep.subr.mxu0 0.0
    %1046 = vmatpush1.msra.mxu0 %v335
    %1047 = vmatprep.subr.mxu0 0.0
    %1048 = vmatpush1.msra.mxu0 %v336
    %1049 = vmatprep.subr.mxu0 0.0
    %1050 = vmatpush1.msra.mxu0 0.0
    %1051 = vmatprep.subr.mxu0 0.0
    %1052 = vmatpush1.msra.mxu0 0.0
    %1053 = vmatprep.subr.mxu0 0.0
    %1054 = vmatpush1.msra.mxu0 0.0
    %1055 = vmatprep.subr.mxu0 0.0
    %1056 = vmatpush1.msra.mxu0 0.0
    %1057 = vmatprep.subr.mxu0 0.0
    %1058 = vmatpush1.msra.mxu0 0.0
    %1059 = vmatprep.subr.mxu0 0.0
    %1060 = vmatpush1.msra.mxu0 0.0
    %1061 = vmatprep.subr.mxu0 0.0
    %1062 = vmatpush1.msra.mxu0 0.0
    %1063 = vmatprep.subr.mxu0 0.0
    %1064 = vmatpush1.msra.mxu0 0.0
    %1065 = vmatprep.subr.mxu0 0.0
    %1066 = vmatpush1.msra.mxu0 0.0
    %1067 = vmatprep.subr.mxu0 0.0
    %1068 = vmatpush1.msra.mxu0 0.0
    %1069 = vmatprep.subr.mxu0 0.0
    %1070 = vmatpush1.msra.mxu0 0.0
    %1071 = vmatprep.subr.mxu0 0.0
    %1072 = vmatpush1.msra.mxu0 0.0
    %1073 = vmatprep.subr.mxu0 0.0
    %1074 = vmatpush1.msra.mxu0 0.0
    %1075 = vmatprep.subr.mxu0 0.0
    %1076 = vmatpush1.msra.mxu0 0.0
    %1077 = vmatprep.subr.mxu0 0.0
    %1078 = vmatpush1.msra.mxu0 0.0
    %1079 = vmatprep.subr.mxu0 0.0
    %1080 = vmatpush1.msra.mxu0 0.0
    %1081 = vmatprep.subr.mxu0 0.0
    %1082 = vmatpush1.msra.mxu0 0.0
    %1083 = vmatprep.subr.mxu0 0.0
    %1084 = vmatpush1.msra.mxu0 0.0
    %1085 = vmatprep.subr.mxu0 0.0
    %1086 = vmatpush1.msra.mxu0 0.0
    %1087 = vmatprep.subr.mxu0 0.0
    %1088 = vmatpush1.msra.mxu0 0.0
    %1089 = vmatprep.subr.mxu0 0.0
    %1090 = vmatpush1.msra.mxu0 0.0
    %1091 = vmatprep.subr.mxu0 0.0
    %1092 = vmatpush1.msra.mxu0 0.0
    %1093 = vmatprep.subr.mxu0 0.0
    %1094 = vmatpush1.msra.mxu0 0.0
    %1095 = vmatprep.subr.mxu0 0.0
    %1096 = vmatpush1.msra.mxu0 0.0
    %1097 = vmatprep.subr.mxu0 0.0
    %1098 = vmatpush1.msra.mxu0 0.0
    %1099 = vmatprep.subr.mxu0 0.0
    %1100 = vmatpush1.msra.mxu0 0.0
    %1101 = vmatprep.subr.mxu0 0.0
    %1102 = vmatpush1.msra.mxu0 0.0
    %1103 = vmatprep.subr.mxu0 0.0
    %1104 = vmatpush1.msra.mxu0 0.0
    %1105 = vmatprep.mubr.f32.mxu0 0.0
    %1106 = vmatmul.mubr.f32.gmra.mrb[0].mxu0 %v1039
    %v1107 = vpop.f32.mrb[0].mxu0
    %v1108 = vadd.f32 0.0, %v1107
    %v1109 = vpop.f32.mrb[0].mxu0
    %1110 = vdwg.mxu0
    %v1111 = vadd.f32 %v330, %v1108
    %v1112 = vxor.u32 %v1111, 2147483648
    %v1113 = vmul.f32 %v1112, 1.442695
    %v1114 = vpow.pop %v1113
    %v1115 = vadd.f32 %v1114, 1.0
    %v1116 = vrcp.pop %v1115
    %v1117 = vmul.f32 1.0, %v1116
    %v1118 = vtanh.pop %v1111
    %v1119 = vmul.f32 %v1117, %v1029
    %1121 = vrot.lane.b32.xlu0 %v1118, 64
    %v1122 = vpop.permute.xlu0 %1121
    %v1124 = vmul.f32 %v1117, %v1122
    %1126 = vrot.lane.b32.xlu0 %v1124, 32
    %v1127 = vpop.permute.xlu0 %1126
    %v1129 = vadd.f32 %v1119, %v1127
    %v1130 = vtanh.pop %v1129
    %1132 = vrot.lane.b32.xlu0 %v1130, 64
    %v1133 = vpop.permute.xlu0 %1132
    %v1135 = vmul.f32 %v1117, %v1133
    %v1136 = vld [vmem:[#allocation6] sm:$0xff]
    %v1137 = vld [vmem:[#allocation6 + $0x8] sm:$0xff]
    %v1138 = vld [vmem:[#allocation6 + $0x10] sm:$0xff]
    %v1139 = vld [vmem:[#allocation6 + $0x18] sm:$0xff]
    %v1140 = vld [vmem:[%s8] sm:$0x1]
    %v1141 = vlaneseq
    %v1142 = vshrl.u32 %v1141, 7
    %v1143 = vsub.s32 0, %v1142
    %v1144 = vrot.slane %v1140, %v1143
    %1146 = vrot.lane.b32.xlu0 %v1135, 32
    %v1147 = vpop.permute.xlu0 %1146
    %v1148 = vsel %vm337, %v1147, 0
    %1150 = vmatprep.subr.mxu0 0.0
    %1151 = vmatpush1.msra.mxu0 %v1136
    %1152 = vmatprep.subr.mxu0 0.0
    %1153 = vmatpush1.msra.mxu0 %v1137
    %1154 = vmatprep.subr.mxu0 0.0
    %1155 = vmatpush1.msra.mxu0 %v1138
    %1156 = vmatprep.subr.mxu0 0.0
    %1157 = vmatpush1.msra.mxu0 %v1139
    %1158 = vmatprep.subr.mxu0 0.0
    %1159 = vmatpush1.msra.mxu0 0.0
    %1160 = vmatprep.subr.mxu0 0.0
    %1161 = vmatpush1.msra.mxu0 0.0
    %1162 = vmatprep.subr.mxu0 0.0
    %1163 = vmatpush1.msra.mxu0 0.0
    %1164 = vmatprep.subr.mxu0 0.0
    %1165 = vmatpush1.msra.mxu0 0.0
    %1166 = vmatprep.subr.mxu0 0.0
    %1167 = vmatpush1.msra.mxu0 0.0
    %1168 = vmatprep.subr.mxu0 0.0
    %1169 = vmatpush1.msra.mxu0 0.0
    %1170 = vmatprep.subr.mxu0 0.0
    %1171 = vmatpush1.msra.mxu0 0.0
    %1172 = vmatprep.subr.mxu0 0.0
    %1173 = vmatpush1.msra.mxu0 0.0
    %1174 = vmatprep.subr.mxu0 0.0
    %1175 = vmatpush1.msra.mxu0 0.0
    %1176 = vmatprep.subr.mxu0 0.0
    %1177 = vmatpush1.msra.mxu0 0.0
    %1178 = vmatprep.subr.mxu0 0.0
    %1179 = vmatpush1.msra.mxu0 0.0
    %1180 = vmatprep.subr.mxu0 0.0
    %1181 = vmatpush1.msra.mxu0 0.0
    %1182 = vmatprep.subr.mxu0 0.0
    %1183 = vmatpush1.msra.mxu0 0.0
    %1184 = vmatprep.subr.mxu0 0.0
    %1185 = vmatpush1.msra.mxu0 0.0
    %1186 = vmatprep.subr.mxu0 0.0
    %1187 = vmatpush1.msra.mxu0 0.0
    %1188 = vmatprep.subr.mxu0 0.0
    %1189 = vmatpush1.msra.mxu0 0.0
    %1190 = vmatprep.subr.mxu0 0.0
    %1191 = vmatpush1.msra.mxu0 0.0
    %1192 = vmatprep.subr.mxu0 0.0
    %1193 = vmatpush1.msra.mxu0 0.0
    %1194 = vmatprep.subr.mxu0 0.0
    %1195 = vmatpush1.msra.mxu0 0.0
    %1196 = vmatprep.subr.mxu0 0.0
    %1197 = vmatpush1.msra.mxu0 0.0
    %1198 = vmatprep.subr.mxu0 0.0
    %1199 = vmatpush1.msra.mxu0 0.0
    %1200 = vmatprep.subr.mxu0 0.0
    %1201 = vmatpush1.msra.mxu0 0.0
    %1202 = vmatprep.subr.mxu0 0.0
    %1203 = vmatpush1.msra.mxu0 0.0
    %1204 = vmatprep.subr.mxu0 0.0
    %1205 = vmatpush1.msra.mxu0 0.0
    %1206 = vmatprep.subr.mxu0 0.0
    %1207 = vmatpush1.msra.mxu0 0.0
    %1208 = vmatprep.subr.mxu0 0.0
    %1209 = vmatpush1.msra.mxu0 0.0
    %1210 = vmatprep.subr.mxu0 0.0
    %1211 = vmatpush1.msra.mxu0 0.0
    %1212 = vmatprep.subr.mxu0 0.0
    %1213 = vmatpush1.msra.mxu0 0.0
    %1214 = vmatprep.mubr.f32.mxu0 0.0
    %1215 = vmatmul.mubr.f32.gmra.mrb[0].mxu0 %v1148
    %v1216 = vpop.f32.mrb[0].mxu0
    %v1217 = vadd.f32 %v1144, %v1216
    %v1218 = vpop.f32.mrb[0].mxu0
    %1219 = vdwg.mxu0
    %1220 = vst [vmem:[%s9] sm:$0xff] %v1217
    %v1221 = vld [vmem:[%s4] sm:$0xff]
    %v1222 = vld [vmem:[%s4 + $0x8] sm:$0xff]
    %v1223 = vld [vmem:[%s4 + $0x10] sm:$0xff]
    %v1224 = vld [vmem:[%s4 + $0x18] sm:$0xff]
    %v1225 = vld [vmem:[%s4 + $0x20] sm:$0xff]
    %v1226 = vld [vmem:[%s4 + $0x28] sm:$0xff]
    %v1227 = vld [vmem:[%s4 + $0x30] sm:$0xff]
    %v1228 = vld [vmem:[%s4 + $0x38] sm:$0xff]
    %v1229 = vld [vmem:[%s4 + $0x40] sm:$0xff]
    %v1230 = vld [vmem:[%s4 + $0x48] sm:$0xff]
    %v1231 = vld [vmem:[%s4 + $0x50] sm:$0xff]
    %v1232 = vld [vmem:[%s4 + $0x58] sm:$0xff]
    %v1233 = vld [vmem:[%s4 + $0x60] sm:$0xff]
    %v1234 = vld [vmem:[%s4 + $0x68] sm:$0xff]
    %v1235 = vld [vmem:[%s4 + $0x70] sm:$0xff]
    %v1236 = vld [vmem:[%s4 + $0x78] sm:$0xff]
    %v1237 = vld [vmem:[%s8 + $0x1] sm:$0x1]
    %v1238 = vlaneseq
    %v1239 = vshrl.u32 %v1238, 7
    %v1240 = vsub.s32 0, %v1239
    %v1241 = vrot.slane %v1237, %v1240
    %1242 = vmatprep.subr.mxu0 0.0
    %1243 = vmatpush1.msra.mxu0 %v1221
    %1244 = vmatprep.subr.mxu0 0.0
    %1245 = vmatpush1.msra.mxu0 %v1222
    %1246 = vmatprep.subr.mxu0 0.0
    %1247 = vmatpush1.msra.mxu0 %v1223
    %1248 = vmatprep.subr.mxu0 0.0
    %1249 = vmatpush1.msra.mxu0 %v1224
    %1250 = vmatprep.subr.mxu0 0.0
    %1251 = vmatpush1.msra.mxu0 %v1225
    %1252 = vmatprep.subr.mxu0 0.0
    %1253 = vmatpush1.msra.mxu0 %v1226
    %1254 = vmatprep.subr.mxu0 0.0
    %1255 = vmatpush1.msra.mxu0 %v1227
    %1256 = vmatprep.subr.mxu0 0.0
    %1257 = vmatpush1.msra.mxu0 %v1228
    %1258 = vmatprep.subr.mxu0 0.0
    %1259 = vmatpush1.msra.mxu0 %v1229
    %1260 = vmatprep.subr.mxu0 0.0
    %1261 = vmatpush1.msra.mxu0 %v1230
    %1262 = vmatprep.subr.mxu0 0.0
    %1263 = vmatpush1.msra.mxu0 %v1231
    %1264 = vmatprep.subr.mxu0 0.0
    %1265 = vmatpush1.msra.mxu0 %v1232
    %1266 = vmatprep.subr.mxu0 0.0
    %1267 = vmatpush1.msra.mxu0 %v1233
    %1268 = vmatprep.subr.mxu0 0.0
    %1269 = vmatpush1.msra.mxu0 %v1234
    %1270 = vmatprep.subr.mxu0 0.0
    %1271 = vmatpush1.msra.mxu0 %v1235
    %1272 = vmatprep.subr.mxu0 0.0
    %1273 = vmatpush1.msra.mxu0 %v1236
    %1274 = vmatprep.subr.mxu0 0.0
    %1275 = vmatpush1.msra.mxu0 0.0
    %1276 = vmatprep.subr.mxu0 0.0
    %1277 = vmatpush1.msra.mxu0 0.0
    %1278 = vmatprep.subr.mxu0 0.0
    %1279 = vmatpush1.msra.mxu0 0.0
    %1280 = vmatprep.subr.mxu0 0.0
    %1281 = vmatpush1.msra.mxu0 0.0
    %1282 = vmatprep.subr.mxu0 0.0
    %1283 = vmatpush1.msra.mxu0 0.0
    %1284 = vmatprep.subr.mxu0 0.0
    %1285 = vmatpush1.msra.mxu0 0.0
    %1286 = vmatprep.subr.mxu0 0.0
    %1287 = vmatpush1.msra.mxu0 0.0
    %1288 = vmatprep.subr.mxu0 0.0
    %1289 = vmatpush1.msra.mxu0 0.0
    %1290 = vmatprep.subr.mxu0 0.0
    %1291 = vmatpush1.msra.mxu0 0.0
    %1292 = vmatprep.subr.mxu0 0.0
    %1293 = vmatpush1.msra.mxu0 0.0
    %1294 = vmatprep.subr.mxu0 0.0
    %1295 = vmatpush1.msra.mxu0 0.0
    %1296 = vmatprep.subr.mxu0 0.0
    %1297 = vmatpush1.msra.mxu0 0.0
    %1298 = vmatprep.subr.mxu0 0.0
    %1299 = vmatpush1.msra.mxu0 0.0
    %1300 = vmatprep.subr.mxu0 0.0
    %1301 = vmatpush1.msra.mxu0 0.0
    %1302 = vmatprep.subr.mxu0 0.0
    %1303 = vmatpush1.msra.mxu0 0.0
    %1304 = vmatprep.subr.mxu0 0.0
    %1305 = vmatpush1.msra.mxu0 0.0
    %1306 = vmatprep.mubr.f32.mxu0 0.0
    %1307 = vmatmul.mubr.f32.gmra.mrb[0].mxu0 %v1217
    %v1308 = vpop.f32.mrb[0].mxu0
    %v1309 = vadd.f32 %v1241, %v1308
    %v1310 = vpop.f32.mrb[0].mxu0
    %1311 = vdwg.mxu0
    %v1312 = vld [vmem:[#allocation7] sm:$0xff]
    %v1313 = vld [vmem:[#allocation7 + $0x8] sm:$0xff]
    %v1314 = vld [vmem:[%s8 + $0x2] sm:$0x1]
    %v1315 = vlaneseq
    %v1316 = vshrl.u32 %v1315, 7
    %v1317 = vsub.s32 0, %v1316
    %v1318 = vrot.slane %v1314, %v1317
    %v1320 = vsel %vm203, %v1309, 0
    %1322 = vmatprep.subr.mxu0 0.0
    %1323 = vmatpush1.msra.mxu0 %v1312
    %1324 = vmatprep.subr.mxu0 0.0
    %1325 = vmatpush1.msra.mxu0 %v1313
    %1326 = vmatprep.subr.mxu0 0.0
    %1327 = vmatpush1.msra.mxu0 0.0
    %1328 = vmatprep.subr.mxu0 0.0
    %1329 = vmatpush1.msra.mxu0 0.0
    %1330 = vmatprep.subr.mxu0 0.0
    %1331 = vmatpush1.msra.mxu0 0.0
    %1332 = vmatprep.subr.mxu0 0.0
    %1333 = vmatpush1.msra.mxu0 0.0
    %1334 = vmatprep.subr.mxu0 0.0
    %1335 = vmatpush1.msra.mxu0 0.0
    %1336 = vmatprep.subr.mxu0 0.0
    %1337 = vmatpush1.msra.mxu0 0.0
    %1338 = vmatprep.subr.mxu0 0.0
    %1339 = vmatpush1.msra.mxu0 0.0
    %1340 = vmatprep.subr.mxu0 0.0
    %1341 = vmatpush1.msra.mxu0 0.0
    %1342 = vmatprep.subr.mxu0 0.0
    %1343 = vmatpush1.msra.mxu0 0.0
    %1344 = vmatprep.subr.mxu0 0.0
    %1345 = vmatpush1.msra.mxu0 0.0
    %1346 = vmatprep.subr.mxu0 0.0
    %1347 = vmatpush1.msra.mxu0 0.0
    %1348 = vmatprep.subr.mxu0 0.0
    %1349 = vmatpush1.msra.mxu0 0.0
    %1350 = vmatprep.subr.mxu0 0.0
    %1351 = vmatpush1.msra.mxu0 0.0
    %1352 = vmatprep.subr.mxu0 0.0
    %1353 = vmatpush1.msra.mxu0 0.0
    %1354 = vmatprep.subr.mxu0 0.0
    %1355 = vmatpush1.msra.mxu0 0.0
    %1356 = vmatprep.subr.mxu0 0.0
    %1357 = vmatpush1.msra.mxu0 0.0
    %1358 = vmatprep.subr.mxu0 0.0
    %1359 = vmatpush1.msra.mxu0 0.0
    %1360 = vmatprep.subr.mxu0 0.0
    %1361 = vmatpush1.msra.mxu0 0.0
    %1362 = vmatprep.subr.mxu0 0.0
    %1363 = vmatpush1.msra.mxu0 0.0
    %1364 = vmatprep.subr.mxu0 0.0
    %1365 = vmatpush1.msra.mxu0 0.0
    %1366 = vmatprep.subr.mxu0 0.0
    %1367 = vmatpush1.msra.mxu0 0.0
    %1368 = vmatprep.subr.mxu0 0.0
    %1369 = vmatpush1.msra.mxu0 0.0
    %1370 = vmatprep.subr.mxu0 0.0
    %1371 = vmatpush1.msra.mxu0 0.0
    %1372 = vmatprep.subr.mxu0 0.0
    %1373 = vmatpush1.msra.mxu0 0.0
    %1374 = vmatprep.subr.mxu0 0.0
    %1375 = vmatpush1.msra.mxu0 0.0
    %1376 = vmatprep.subr.mxu0 0.0
    %1377 = vmatpush1.msra.mxu0 0.0
    %1378 = vmatprep.subr.mxu0 0.0
    %1379 = vmatpush1.msra.mxu0 0.0
    %1380 = vmatprep.subr.mxu0 0.0
    %1381 = vmatpush1.msra.mxu0 0.0
    %1382 = vmatprep.subr.mxu0 0.0
    %1383 = vmatpush1.msra.mxu0 0.0
    %1384 = vmatprep.subr.mxu0 0.0
    %1385 = vmatpush1.msra.mxu0 0.0
    %1386 = vmatprep.mubr.f32.mxu0 0.0
    %1387 = vmatmul.mubr.f32.gmra.mrb[0].mxu0 %v1320
    %v1388 = vpop.f32.mrb[0].mxu0
    %v1389 = vadd.f32 %v1318, %v1388
    %v1390 = vpop.f32.mrb[0].mxu0
    %1391 = vdwg.mxu0
    %v1392 = vld [vmem:[#allocation9] sm:$0xff]
    %v1393 = vld [vmem:[#allocation9 + $0x8] sm:$0xff]
    %v1394 = vld [vmem:[#allocation9 + $0x10] sm:$0xff]
    %v1395 = vld [vmem:[#allocation9 + $0x18] sm:$0xff]
    %1396 = vmatprep.subr.mxu0 0.0
    %1397 = vmatpush1.msra.mxu0 %v1392
    %1398 = vmatprep.subr.mxu0 0.0
    %1399 = vmatpush1.msra.mxu0 %v1393
    %1400 = vmatprep.subr.mxu0 0.0
    %1401 = vmatpush1.msra.mxu0 %v1394
    %1402 = vmatprep.subr.mxu0 0.0
    %1403 = vmatpush1.msra.mxu0 %v1395
    %1404 = vmatprep.subr.mxu0 0.0
    %1405 = vmatpush1.msra.mxu0 0.0
    %1406 = vmatprep.subr.mxu0 0.0
    %1407 = vmatpush1.msra.mxu0 0.0
    %1408 = vmatprep.subr.mxu0 0.0
    %1409 = vmatpush1.msra.mxu0 0.0
    %1410 = vmatprep.subr.mxu0 0.0
    %1411 = vmatpush1.msra.mxu0 0.0
    %1412 = vmatprep.subr.mxu0 0.0
    %1413 = vmatpush1.msra.mxu0 0.0
    %1414 = vmatprep.subr.mxu0 0.0
    %1415 = vmatpush1.msra.mxu0 0.0
    %1416 = vmatprep.subr.mxu0 0.0
    %1417 = vmatpush1.msra.mxu0 0.0
    %1418 = vmatprep.subr.mxu0 0.0
    %1419 = vmatpush1.msra.mxu0 0.0
    %1420 = vmatprep.subr.mxu0 0.0
    %1421 = vmatpush1.msra.mxu0 0.0
    %1422 = vmatprep.subr.mxu0 0.0
    %1423 = vmatpush1.msra.mxu0 0.0
    %1424 = vmatprep.subr.mxu0 0.0
    %1425 = vmatpush1.msra.mxu0 0.0
    %1426 = vmatprep.subr.mxu0 0.0
    %1427 = vmatpush1.msra.mxu0 0.0
    %1428 = vmatprep.subr.mxu0 0.0
    %1429 = vmatpush1.msra.mxu0 0.0
    %1430 = vmatprep.subr.mxu0 0.0
    %1431 = vmatpush1.msra.mxu0 0.0
    %1432 = vmatprep.subr.mxu0 0.0
    %1433 = vmatpush1.msra.mxu0 0.0
    %1434 = vmatprep.subr.mxu0 0.0
    %1435 = vmatpush1.msra.mxu0 0.0
    %1436 = vmatprep.subr.mxu0 0.0
    %1437 = vmatpush1.msra.mxu0 0.0
    %1438 = vmatprep.subr.mxu0 0.0
    %1439 = vmatpush1.msra.mxu0 0.0
    %1440 = vmatprep.subr.mxu0 0.0
    %1441 = vmatpush1.msra.mxu0 0.0
    %1442 = vmatprep.subr.mxu0 0.0
    %1443 = vmatpush1.msra.mxu0 0.0
    %1444 = vmatprep.subr.mxu0 0.0
    %1445 = vmatpush1.msra.mxu0 0.0
    %1446 = vmatprep.subr.mxu0 0.0
    %1447 = vmatpush1.msra.mxu0 0.0
    %1448 = vmatprep.subr.mxu0 0.0
    %1449 = vmatpush1.msra.mxu0 0.0
    %1450 = vmatprep.subr.mxu0 0.0
    %1451 = vmatpush1.msra.mxu0 0.0
    %1452 = vmatprep.subr.mxu0 0.0
    %1453 = vmatpush1.msra.mxu0 0.0
    %1454 = vmatprep.subr.mxu0 0.0
    %1455 = vmatpush1.msra.mxu0 0.0
    %1456 = vmatprep.subr.mxu0 0.0
    %1457 = vmatpush1.msra.mxu0 0.0
    %1458 = vmatprep.subr.mxu0 0.0
    %1459 = vmatpush1.msra.mxu0 0.0
    %1460 = vmatprep.mubr.f32.mxu0 0.0
    %1461 = vmatmul.mubr.f32.gmra.mrb[0].mxu0 %v339
    %v1462 = vpop.f32.mrb[0].mxu0
    %v1463 = vadd.f32 0.0, %v1462
    %v1464 = vpop.f32.mrb[0].mxu0
    %1465 = vdwg.mxu0
    %v1466 = vadd.f32 %v1389, %v1463
    %v1467 = vxor.u32 %v1466, 2147483648
    %v1468 = vmul.f32 %v1467, 1.442695
    %v1469 = vpow.pop %v1468
    %v1470 = vadd.f32 %v1469, 1.0
    %v1471 = vrcp.pop %v1470
    %v1472 = vmul.f32 1.0, %v1471
    %v1473 = vtanh.pop %v1466
    %v1474 = vmul.f32 %v1472, 0.0
    %1476 = vrot.lane.b32.xlu0 %v1473, 64
    %v1477 = vpop.permute.xlu0 %1476
    %v1479 = vmul.f32 %v1472, %v1477
    %1481 = vrot.lane.b32.xlu0 %v1479, 32
    %v1482 = vpop.permute.xlu0 %1481
    %v1484 = vadd.f32 %v1474, %v1482
    %v1485 = vtanh.pop %v1484
    %1487 = vrot.lane.b32.xlu0 %v1485, 64
    %v1488 = vpop.permute.xlu0 %1487
    %v1490 = vmul.f32 %v1472, %v1488
    %1492 = vrot.lane.b32.xlu0 %v1490, 32
    %v1493 = vpop.permute.xlu0 %1492
    %v1494 = vsel %vm337, %v1493, 0
    %1496 = vmatprep.subr.mxu0 0.0
    %1497 = vmatpush1.msra.mxu0 %v1392
    %1498 = vmatprep.subr.mxu0 0.0
    %1499 = vmatpush1.msra.mxu0 %v1393
    %1500 = vmatprep.subr.mxu0 0.0
    %1501 = vmatpush1.msra.mxu0 %v1394
    %1502 = vmatprep.subr.mxu0 0.0
    %1503 = vmatpush1.msra.mxu0 %v1395
    %1504 = vmatprep.subr.mxu0 0.0
    %1505 = vmatpush1.msra.mxu0 0.0
    %1506 = vmatprep.subr.mxu0 0.0
    %1507 = vmatpush1.msra.mxu0 0.0
    %1508 = vmatprep.subr.mxu0 0.0
    %1509 = vmatpush1.msra.mxu0 0.0
    %1510 = vmatprep.subr.mxu0 0.0
    %1511 = vmatpush1.msra.mxu0 0.0
    %1512 = vmatprep.subr.mxu0 0.0
    %1513 = vmatpush1.msra.mxu0 0.0
    %1514 = vmatprep.subr.mxu0 0.0
    %1515 = vmatpush1.msra.mxu0 0.0
    %1516 = vmatprep.subr.mxu0 0.0
    %1517 = vmatpush1.msra.mxu0 0.0
    %1518 = vmatprep.subr.mxu0 0.0
    %1519 = vmatpush1.msra.mxu0 0.0
    %1520 = vmatprep.subr.mxu0 0.0
    %1521 = vmatpush1.msra.mxu0 0.0
    %1522 = vmatprep.subr.mxu0 0.0
    %1523 = vmatpush1.msra.mxu0 0.0
    %1524 = vmatprep.subr.mxu0 0.0
    %1525 = vmatpush1.msra.mxu0 0.0
    %1526 = vmatprep.subr.mxu0 0.0
    %1527 = vmatpush1.msra.mxu0 0.0
    %1528 = vmatprep.subr.mxu0 0.0
    %1529 = vmatpush1.msra.mxu0 0.0
    %1530 = vmatprep.subr.mxu0 0.0
    %1531 = vmatpush1.msra.mxu0 0.0
    %1532 = vmatprep.subr.mxu0 0.0
    %1533 = vmatpush1.msra.mxu0 0.0
    %1534 = vmatprep.subr.mxu0 0.0
    %1535 = vmatpush1.msra.mxu0 0.0
    %1536 = vmatprep.subr.mxu0 0.0
    %1537 = vmatpush1.msra.mxu0 0.0
    %1538 = vmatprep.subr.mxu0 0.0
    %1539 = vmatpush1.msra.mxu0 0.0
    %1540 = vmatprep.subr.mxu0 0.0
    %1541 = vmatpush1.msra.mxu0 0.0
    %1542 = vmatprep.subr.mxu0 0.0
    %1543 = vmatpush1.msra.mxu0 0.0
    %1544 = vmatprep.subr.mxu0 0.0
    %1545 = vmatpush1.msra.mxu0 0.0
    %1546 = vmatprep.subr.mxu0 0.0
    %1547 = vmatpush1.msra.mxu0 0.0
    %1548 = vmatprep.subr.mxu0 0.0
    %1549 = vmatpush1.msra.mxu0 0.0
    %1550 = vmatprep.subr.mxu0 0.0
    %1551 = vmatpush1.msra.mxu0 0.0
    %1552 = vmatprep.subr.mxu0 0.0
    %1553 = vmatpush1.msra.mxu0 0.0
    %1554 = vmatprep.subr.mxu0 0.0
    %1555 = vmatpush1.msra.mxu0 0.0
    %1556 = vmatprep.subr.mxu0 0.0
    %1557 = vmatpush1.msra.mxu0 0.0
    %1558 = vmatprep.subr.mxu0 0.0
    %1559 = vmatpush1.msra.mxu0 0.0
    %1560 = vmatprep.mubr.f32.mxu0 0.0
    %1561 = vmatmul.mubr.f32.gmra.mrb[0].mxu0 %v1494
    %v1562 = vpop.f32.mrb[0].mxu0
    %v1563 = vadd.f32 0.0, %v1562
    %v1564 = vpop.f32.mrb[0].mxu0
    %1565 = vdwg.mxu0
    %v1566 = vadd.f32 %v1389, %v1563
    %v1567 = vxor.u32 %v1566, 2147483648
    %v1568 = vmul.f32 %v1567, 1.442695
    %v1569 = vpow.pop %v1568
    %v1570 = vadd.f32 %v1569, 1.0
    %v1571 = vrcp.pop %v1570
    %v1572 = vmul.f32 1.0, %v1571
    %v1573 = vtanh.pop %v1566
    %v1574 = vmul.f32 %v1572, %v1484
    %1576 = vrot.lane.b32.xlu0 %v1573, 64
    %v1577 = vpop.permute.xlu0 %1576
    %v1579 = vmul.f32 %v1572, %v1577
    %1581 = vrot.lane.b32.xlu0 %v1579, 32
    %v1582 = vpop.permute.xlu0 %1581
    %v1584 = vadd.f32 %v1574, %v1582
    %v1585 = vtanh.pop %v1584
    %1587 = vrot.lane.b32.xlu0 %v1585, 64
    %v1588 = vpop.permute.xlu0 %1587
    %v1590 = vmul.f32 %v1572, %v1588
    %1592 = vrot.lane.b32.xlu0 %v1590, 32
    %v1593 = vpop.permute.xlu0 %1592
    %v1594 = vsel %vm337, %v1593, 0
    %1596 = vmatprep.subr.mxu0 0.0
    %1597 = vmatpush1.msra.mxu0 %v1392
    %1598 = vmatprep.subr.mxu0 0.0
    %1599 = vmatpush1.msra.mxu0 %v1393
    %1600 = vmatprep.subr.mxu0 0.0
    %1601 = vmatpush1.msra.mxu0 %v1394
    %1602 = vmatprep.subr.mxu0 0.0
    %1603 = vmatpush1.msra.mxu0 %v1395
    %1604 = vmatprep.subr.mxu0 0.0
    %1605 = vmatpush1.msra.mxu0 0.0
    %1606 = vmatprep.subr.mxu0 0.0
    %1607 = vmatpush1.msra.mxu0 0.0
    %1608 = vmatprep.subr.mxu0 0.0
    %1609 = vmatpush1.msra.mxu0 0.0
    %1610 = vmatprep.subr.mxu0 0.0
    %1611 = vmatpush1.msra.mxu0 0.0
    %1612 = vmatprep.subr.mxu0 0.0
    %1613 = vmatpush1.msra.mxu0 0.0
    %1614 = vmatprep.subr.mxu0 0.0
    %1615 = vmatpush1.msra.mxu0 0.0
    %1616 = vmatprep.subr.mxu0 0.0
    %1617 = vmatpush1.msra.mxu0 0.0
    %1618 = vmatprep.subr.mxu0 0.0
    %1619 = vmatpush1.msra.mxu0 0.0
    %1620 = vmatprep.subr.mxu0 0.0
    %1621 = vmatpush1.msra.mxu0 0.0
    %1622 = vmatprep.subr.mxu0 0.0
    %1623 = vmatpush1.msra.mxu0 0.0
    %1624 = vmatprep.subr.mxu0 0.0
    %1625 = vmatpush1.msra.mxu0 0.0
    %1626 = vmatprep.subr.mxu0 0.0
    %1627 = vmatpush1.msra.mxu0 0.0
    %1628 = vmatprep.subr.mxu0 0.0
    %1629 = vmatpush1.msra.mxu0 0.0
    %1630 = vmatprep.subr.mxu0 0.0
    %1631 = vmatpush1.msra.mxu0 0.0
    %1632 = vmatprep.subr.mxu0 0.0
    %1633 = vmatpush1.msra.mxu0 0.0
    %1634 = vmatprep.subr.mxu0 0.0
    %1635 = vmatpush1.msra.mxu0 0.0
    %1636 = vmatprep.subr.mxu0 0.0
    %1637 = vmatpush1.msra.mxu0 0.0
    %1638 = vmatprep.subr.mxu0 0.0
    %1639 = vmatpush1.msra.mxu0 0.0
    %1640 = vmatprep.subr.mxu0 0.0
    %1641 = vmatpush1.msra.mxu0 0.0
    %1642 = vmatprep.subr.mxu0 0.0
    %1643 = vmatpush1.msra.mxu0 0.0
    %1644 = vmatprep.subr.mxu0 0.0
    %1645 = vmatpush1.msra.mxu0 0.0
    %1646 = vmatprep.subr.mxu0 0.0
    %1647 = vmatpush1.msra.mxu0 0.0
    %1648 = vmatprep.subr.mxu0 0.0
    %1649 = vmatpush1.msra.mxu0 0.0
    %1650 = vmatprep.subr.mxu0 0.0
    %1651 = vmatpush1.msra.mxu0 0.0
    %1652 = vmatprep.subr.mxu0 0.0
    %1653 = vmatpush1.msra.mxu0 0.0
    %1654 = vmatprep.subr.mxu0 0.0
    %1655 = vmatpush1.msra.mxu0 0.0
    %1656 = vmatprep.subr.mxu0 0.0
    %1657 = vmatpush1.msra.mxu0 0.0
    %1658 = vmatprep.subr.mxu0 0.0
    %1659 = vmatpush1.msra.mxu0 0.0
    %1660 = vmatprep.mubr.f32.mxu0 0.0
    %1661 = vmatmul.mubr.f32.gmra.mrb[0].mxu0 %v1594
    %v1662 = vpop.f32.mrb[0].mxu0
    %v1663 = vadd.f32 0.0, %v1662
    %v1664 = vpop.f32.mrb[0].mxu0
    %1665 = vdwg.mxu0
    %v1666 = vadd.f32 %v1389, %v1663
    %v1667 = vxor.u32 %v1666, 2147483648
    %v1668 = vmul.f32 %v1667, 1.442695
    %v1669 = vpow.pop %v1668
    %v1670 = vadd.f32 %v1669, 1.0
    %v1671 = vrcp.pop %v1670
    %v1672 = vmul.f32 1.0, %v1671
    %v1673 = vtanh.pop %v1666
    %v1674 = vmul.f32 %v1672, %v1584
    %1676 = vrot.lane.b32.xlu0 %v1673, 64
    %v1677 = vpop.permute.xlu0 %1676
    %v1679 = vmul.f32 %v1672, %v1677
    %1681 = vrot.lane.b32.xlu0 %v1679, 32
    %v1682 = vpop.permute.xlu0 %1681
    %v1684 = vadd.f32 %v1674, %v1682
    %v1685 = vtanh.pop %v1684
    %1687 = vrot.lane.b32.xlu0 %v1685, 64
    %v1688 = vpop.permute.xlu0 %1687
    %v1690 = vmul.f32 %v1672, %v1688
    %1692 = vrot.lane.b32.xlu0 %v1690, 32
    %v1693 = vpop.permute.xlu0 %1692
    %v1694 = vsel %vm337, %v1693, 0
    %1696 = vmatprep.subr.mxu0 0.0
    %1697 = vmatpush1.msra.mxu0 %v1392
    %1698 = vmatprep.subr.mxu0 0.0
    %1699 = vmatpush1.msra.mxu0 %v1393
    %1700 = vmatprep.subr.mxu0 0.0
    %1701 = vmatpush1.msra.mxu0 %v1394
    %1702 = vmatprep.subr.mxu0 0.0
    %1703 = vmatpush1.msra.mxu0 %v1395
    %1704 = vmatprep.subr.mxu0 0.0
    %1705 = vmatpush1.msra.mxu0 0.0
    %1706 = vmatprep.subr.mxu0 0.0
    %1707 = vmatpush1.msra.mxu0 0.0
    %1708 = vmatprep.subr.mxu0 0.0
    %1709 = vmatpush1.msra.mxu0 0.0
    %1710 = vmatprep.subr.mxu0 0.0
    %1711 = vmatpush1.msra.mxu0 0.0
    %1712 = vmatprep.subr.mxu0 0.0
    %1713 = vmatpush1.msra.mxu0 0.0
    %1714 = vmatprep.subr.mxu0 0.0
    %1715 = vmatpush1.msra.mxu0 0.0
    %1716 = vmatprep.subr.mxu0 0.0
    %1717 = vmatpush1.msra.mxu0 0.0
    %1718 = vmatprep.subr.mxu0 0.0
    %1719 = vmatpush1.msra.mxu0 0.0
    %1720 = vmatprep.subr.mxu0 0.0
    %1721 = vmatpush1.msra.mxu0 0.0
    %1722 = vmatprep.subr.mxu0 0.0
    %1723 = vmatpush1.msra.mxu0 0.0
    %1724 = vmatprep.subr.mxu0 0.0
    %1725 = vmatpush1.msra.mxu0 0.0
    %1726 = vmatprep.subr.mxu0 0.0
    %1727 = vmatpush1.msra.mxu0 0.0
    %1728 = vmatprep.subr.mxu0 0.0
    %1729 = vmatpush1.msra.mxu0 0.0
    %1730 = vmatprep.subr.mxu0 0.0
    %1731 = vmatpush1.msra.mxu0 0.0
    %1732 = vmatprep.subr.mxu0 0.0
    %1733 = vmatpush1.msra.mxu0 0.0
    %1734 = vmatprep.subr.mxu0 0.0
    %1735 = vmatpush1.msra.mxu0 0.0
    %1736 = vmatprep.subr.mxu0 0.0
    %1737 = vmatpush1.msra.mxu0 0.0
    %1738 = vmatprep.subr.mxu0 0.0
    %1739 = vmatpush1.msra.mxu0 0.0
    %1740 = vmatprep.subr.mxu0 0.0
    %1741 = vmatpush1.msra.mxu0 0.0
    %1742 = vmatprep.subr.mxu0 0.0
    %1743 = vmatpush1.msra.mxu0 0.0
    %1744 = vmatprep.subr.mxu0 0.0
    %1745 = vmatpush1.msra.mxu0 0.0
    %1746 = vmatprep.subr.mxu0 0.0
    %1747 = vmatpush1.msra.mxu0 0.0
    %1748 = vmatprep.subr.mxu0 0.0
    %1749 = vmatpush1.msra.mxu0 0.0
    %1750 = vmatprep.subr.mxu0 0.0
    %1751 = vmatpush1.msra.mxu0 0.0
    %1752 = vmatprep.subr.mxu0 0.0
    %1753 = vmatpush1.msra.mxu0 0.0
    %1754 = vmatprep.subr.mxu0 0.0
    %1755 = vmatpush1.msra.mxu0 0.0
    %1756 = vmatprep.subr.mxu0 0.0
    %1757 = vmatpush1.msra.mxu0 0.0
    %1758 = vmatprep.subr.mxu0 0.0
    %1759 = vmatpush1.msra.mxu0 0.0
    %1760 = vmatprep.mubr.f32.mxu0 0.0
    %1761 = vmatmul.mubr.f32.gmra.mrb[0].mxu0 %v1694
    %v1762 = vpop.f32.mrb[0].mxu0
    %v1763 = vadd.f32 0.0, %v1762
    %v1764 = vpop.f32.mrb[0].mxu0
    %1765 = vdwg.mxu0
    %v1766 = vadd.f32 %v1389, %v1763
    %v1767 = vxor.u32 %v1766, 2147483648
    %v1768 = vmul.f32 %v1767, 1.442695
    %v1769 = vpow.pop %v1768
    %v1770 = vadd.f32 %v1769, 1.0
    %v1771 = vrcp.pop %v1770
    %v1772 = vmul.f32 1.0, %v1771
    %v1773 = vtanh.pop %v1766
    %v1774 = vmul.f32 %v1772, %v1684
    %1776 = vrot.lane.b32.xlu0 %v1773, 64
    %v1777 = vpop.permute.xlu0 %1776
    %v1779 = vmul.f32 %v1772, %v1777
    %1781 = vrot.lane.b32.xlu0 %v1779, 32
    %v1782 = vpop.permute.xlu0 %1781
    %v1784 = vadd.f32 %v1774, %v1782
    %v1785 = vtanh.pop %v1784
    %1787 = vrot.lane.b32.xlu0 %v1785, 64
    %v1788 = vpop.permute.xlu0 %1787
    %v1790 = vmul.f32 %v1772, %v1788
    %1792 = vrot.lane.b32.xlu0 %v1790, 32
    %v1793 = vpop.permute.xlu0 %1792
    %v1794 = vsel %vm337, %v1793, 0
    %1796 = vmatprep.subr.mxu0 0.0
    %1797 = vmatpush1.msra.mxu0 %v1392
    %1798 = vmatprep.subr.mxu0 0.0
    %1799 = vmatpush1.msra.mxu0 %v1393
    %1800 = vmatprep.subr.mxu0 0.0
    %1801 = vmatpush1.msra.mxu0 %v1394
    %1802 = vmatprep.subr.mxu0 0.0
    %1803 = vmatpush1.msra.mxu0 %v1395
    %1804 = vmatprep.subr.mxu0 0.0
    %1805 = vmatpush1.msra.mxu0 0.0
    %1806 = vmatprep.subr.mxu0 0.0
    %1807 = vmatpush1.msra.mxu0 0.0
    %1808 = vmatprep.subr.mxu0 0.0
    %1809 = vmatpush1.msra.mxu0 0.0
    %1810 = vmatprep.subr.mxu0 0.0
    %1811 = vmatpush1.msra.mxu0 0.0
    %1812 = vmatprep.subr.mxu0 0.0
    %1813 = vmatpush1.msra.mxu0 0.0
    %1814 = vmatprep.subr.mxu0 0.0
    %1815 = vmatpush1.msra.mxu0 0.0
    %1816 = vmatprep.subr.mxu0 0.0
    %1817 = vmatpush1.msra.mxu0 0.0
    %1818 = vmatprep.subr.mxu0 0.0
    %1819 = vmatpush1.msra.mxu0 0.0
    %1820 = vmatprep.subr.mxu0 0.0
    %1821 = vmatpush1.msra.mxu0 0.0
    %1822 = vmatprep.subr.mxu0 0.0
    %1823 = vmatpush1.msra.mxu0 0.0
    %1824 = vmatprep.subr.mxu0 0.0
    %1825 = vmatpush1.msra.mxu0 0.0
    %1826 = vmatprep.subr.mxu0 0.0
    %1827 = vmatpush1.msra.mxu0 0.0
    %1828 = vmatprep.subr.mxu0 0.0
    %1829 = vmatpush1.msra.mxu0 0.0
    %1830 = vmatprep.subr.mxu0 0.0
    %1831 = vmatpush1.msra.mxu0 0.0
    %1832 = vmatprep.subr.mxu0 0.0
    %1833 = vmatpush1.msra.mxu0 0.0
    %1834 = vmatprep.subr.mxu0 0.0
    %1835 = vmatpush1.msra.mxu0 0.0
    %1836 = vmatprep.subr.mxu0 0.0
    %1837 = vmatpush1.msra.mxu0 0.0
    %1838 = vmatprep.subr.mxu0 0.0
    %1839 = vmatpush1.msra.mxu0 0.0
    %1840 = vmatprep.subr.mxu0 0.0
    %1841 = vmatpush1.msra.mxu0 0.0
    %1842 = vmatprep.subr.mxu0 0.0
    %1843 = vmatpush1.msra.mxu0 0.0
    %1844 = vmatprep.subr.mxu0 0.0
    %1845 = vmatpush1.msra.mxu0 0.0
    %1846 = vmatprep.subr.mxu0 0.0
    %1847 = vmatpush1.msra.mxu0 0.0
    %1848 = vmatprep.subr.mxu0 0.0
    %1849 = vmatpush1.msra.mxu0 0.0
    %1850 = vmatprep.subr.mxu0 0.0
    %1851 = vmatpush1.msra.mxu0 0.0
    %1852 = vmatprep.subr.mxu0 0.0
    %1853 = vmatpush1.msra.mxu0 0.0
    %1854 = vmatprep.subr.mxu0 0.0
    %1855 = vmatpush1.msra.mxu0 0.0
    %1856 = vmatprep.subr.mxu0 0.0
    %1857 = vmatpush1.msra.mxu0 0.0
    %1858 = vmatprep.subr.mxu0 0.0
    %1859 = vmatpush1.msra.mxu0 0.0
    %1860 = vmatprep.mubr.f32.mxu0 0.0
    %1861 = vmatmul.mubr.f32.gmra.mrb[0].mxu0 %v1794
    %v1862 = vpop.f32.mrb[0].mxu0
    %v1863 = vadd.f32 0.0, %v1862
    %v1864 = vpop.f32.mrb[0].mxu0
    %1865 = vdwg.mxu0
    %v1866 = vadd.f32 %v1389, %v1863
    %v1867 = vxor.u32 %v1866, 2147483648
    %v1868 = vmul.f32 %v1867, 1.442695
    %v1869 = vpow.pop %v1868
    %v1870 = vadd.f32 %v1869, 1.0
    %v1871 = vrcp.pop %v1870
    %v1872 = vmul.f32 1.0, %v1871
    %v1873 = vtanh.pop %v1866
    %v1874 = vmul.f32 %v1872, %v1784
    %1876 = vrot.lane.b32.xlu0 %v1873, 64
    %v1877 = vpop.permute.xlu0 %1876
    %v1879 = vmul.f32 %v1872, %v1877
    %1881 = vrot.lane.b32.xlu0 %v1879, 32
    %v1882 = vpop.permute.xlu0 %1881
    %v1884 = vadd.f32 %v1874, %v1882
    %v1885 = vtanh.pop %v1884
    %1887 = vrot.lane.b32.xlu0 %v1885, 64
    %v1888 = vpop.permute.xlu0 %1887
    %v1890 = vmul.f32 %v1872, %v1888
    %1892 = vrot.lane.b32.xlu0 %v1890, 32
    %v1893 = vpop.permute.xlu0 %1892
    %v1894 = vsel %vm337, %v1893, 0
    %1896 = vmatprep.subr.mxu0 0.0
    %1897 = vmatpush1.msra.mxu0 %v1392
    %1898 = vmatprep.subr.mxu0 0.0
    %1899 = vmatpush1.msra.mxu0 %v1393
    %1900 = vmatprep.subr.mxu0 0.0
    %1901 = vmatpush1.msra.mxu0 %v1394
    %1902 = vmatprep.subr.mxu0 0.0
    %1903 = vmatpush1.msra.mxu0 %v1395
    %1904 = vmatprep.subr.mxu0 0.0
    %1905 = vmatpush1.msra.mxu0 0.0
    %1906 = vmatprep.subr.mxu0 0.0
    %1907 = vmatpush1.msra.mxu0 0.0
    %1908 = vmatprep.subr.mxu0 0.0
    %1909 = vmatpush1.msra.mxu0 0.0
    %1910 = vmatprep.subr.mxu0 0.0
    %1911 = vmatpush1.msra.mxu0 0.0
    %1912 = vmatprep.subr.mxu0 0.0
    %1913 = vmatpush1.msra.mxu0 0.0
    %1914 = vmatprep.subr.mxu0 0.0
    %1915 = vmatpush1.msra.mxu0 0.0
    %1916 = vmatprep.subr.mxu0 0.0
    %1917 = vmatpush1.msra.mxu0 0.0
    %1918 = vmatprep.subr.mxu0 0.0
    %1919 = vmatpush1.msra.mxu0 0.0
    %1920 = vmatprep.subr.mxu0 0.0
    %1921 = vmatpush1.msra.mxu0 0.0
    %1922 = vmatprep.subr.mxu0 0.0
    %1923 = vmatpush1.msra.mxu0 0.0
    %1924 = vmatprep.subr.mxu0 0.0
    %1925 = vmatpush1.msra.mxu0 0.0
    %1926 = vmatprep.subr.mxu0 0.0
    %1927 = vmatpush1.msra.mxu0 0.0
    %1928 = vmatprep.subr.mxu0 0.0
    %1929 = vmatpush1.msra.mxu0 0.0
    %1930 = vmatprep.subr.mxu0 0.0
    %1931 = vmatpush1.msra.mxu0 0.0
    %1932 = vmatprep.subr.mxu0 0.0
    %1933 = vmatpush1.msra.mxu0 0.0
    %1934 = vmatprep.subr.mxu0 0.0
    %1935 = vmatpush1.msra.mxu0 0.0
    %1936 = vmatprep.subr.mxu0 0.0
    %1937 = vmatpush1.msra.mxu0 0.0
    %1938 = vmatprep.subr.mxu0 0.0
    %1939 = vmatpush1.msra.mxu0 0.0
    %1940 = vmatprep.subr.mxu0 0.0
    %1941 = vmatpush1.msra.mxu0 0.0
    %1942 = vmatprep.subr.mxu0 0.0
    %1943 = vmatpush1.msra.mxu0 0.0
    %1944 = vmatprep.subr.mxu0 0.0
    %1945 = vmatpush1.msra.mxu0 0.0
    %1946 = vmatprep.subr.mxu0 0.0
    %1947 = vmatpush1.msra.mxu0 0.0
    %1948 = vmatprep.subr.mxu0 0.0
    %1949 = vmatpush1.msra.mxu0 0.0
    %1950 = vmatprep.subr.mxu0 0.0
    %1951 = vmatpush1.msra.mxu0 0.0
    %1952 = vmatprep.subr.mxu0 0.0
    %1953 = vmatpush1.msra.mxu0 0.0
    %1954 = vmatprep.subr.mxu0 0.0
    %1955 = vmatpush1.msra.mxu0 0.0
    %1956 = vmatprep.subr.mxu0 0.0
    %1957 = vmatpush1.msra.mxu0 0.0
    %1958 = vmatprep.subr.mxu0 0.0
    %1959 = vmatpush1.msra.mxu0 0.0
    %1960 = vmatprep.mubr.f32.mxu0 0.0
    %1961 = vmatmul.mubr.f32.gmra.mrb[0].mxu0 %v1894
    %v1962 = vpop.f32.mrb[0].mxu0
    %v1963 = vadd.f32 0.0, %v1962
    %v1964 = vpop.f32.mrb[0].mxu0
    %1965 = vdwg.mxu0
    %v1966 = vadd.f32 %v1389, %v1963
    %v1967 = vxor.u32 %v1966, 2147483648
    %v1968 = vmul.f32 %v1967, 1.442695
    %v1969 = vpow.pop %v1968
    %v1970 = vadd.f32 %v1969, 1.0
    %v1971 = vrcp.pop %v1970
    %v1972 = vmul.f32 1.0, %v1971
    %v1973 = vtanh.pop %v1966
    %v1974 = vmul.f32 %v1972, %v1884
    %1976 = vrot.lane.b32.xlu0 %v1973, 64
    %v1977 = vpop.permute.xlu0 %1976
    %v1979 = vmul.f32 %v1972, %v1977
    %1981 = vrot.lane.b32.xlu0 %v1979, 32
    %v1982 = vpop.permute.xlu0 %1981
    %v1984 = vadd.f32 %v1974, %v1982
    %v1985 = vtanh.pop %v1984
    %1987 = vrot.lane.b32.xlu0 %v1985, 64
    %v1988 = vpop.permute.xlu0 %1987
    %v1990 = vmul.f32 %v1972, %v1988
    %1992 = vrot.lane.b32.xlu0 %v1990, 32
    %v1993 = vpop.permute.xlu0 %1992
    %v1994 = vsel %vm337, %v1993, 0
    %1996 = vmatprep.subr.mxu0 0.0
    %1997 = vmatpush1.msra.mxu0 %v1392
    %1998 = vmatprep.subr.mxu0 0.0
    %1999 = vmatpush1.msra.mxu0 %v1393
    %2000 = vmatprep.subr.mxu0 0.0
    %2001 = vmatpush1.msra.mxu0 %v1394
    %2002 = vmatprep.subr.mxu0 0.0
    %2003 = vmatpush1.msra.mxu0 %v1395
    %2004 = vmatprep.subr.mxu0 0.0
    %2005 = vmatpush1.msra.mxu0 0.0
    %2006 = vmatprep.subr.mxu0 0.0
    %2007 = vmatpush1.msra.mxu0 0.0
    %2008 = vmatprep.subr.mxu0 0.0
    %2009 = vmatpush1.msra.mxu0 0.0
    %2010 = vmatprep.subr.mxu0 0.0
    %2011 = vmatpush1.msra.mxu0 0.0
    %2012 = vmatprep.subr.mxu0 0.0
    %2013 = vmatpush1.msra.mxu0 0.0
    %2014 = vmatprep.subr.mxu0 0.0
    %2015 = vmatpush1.msra.mxu0 0.0
    %2016 = vmatprep.subr.mxu0 0.0
    %2017 = vmatpush1.msra.mxu0 0.0
    %2018 = vmatprep.subr.mxu0 0.0
    %2019 = vmatpush1.msra.mxu0 0.0
    %2020 = vmatprep.subr.mxu0 0.0
    %2021 = vmatpush1.msra.mxu0 0.0
    %2022 = vmatprep.subr.mxu0 0.0
    %2023 = vmatpush1.msra.mxu0 0.0
    %2024 = vmatprep.subr.mxu0 0.0
    %2025 = vmatpush1.msra.mxu0 0.0
    %2026 = vmatprep.subr.mxu0 0.0
    %2027 = vmatpush1.msra.mxu0 0.0
    %2028 = vmatprep.subr.mxu0 0.0
    %2029 = vmatpush1.msra.mxu0 0.0
    %2030 = vmatprep.subr.mxu0 0.0
    %2031 = vmatpush1.msra.mxu0 0.0
    %2032 = vmatprep.subr.mxu0 0.0
    %2033 = vmatpush1.msra.mxu0 0.0
    %2034 = vmatprep.subr.mxu0 0.0
    %2035 = vmatpush1.msra.mxu0 0.0
    %2036 = vmatprep.subr.mxu0 0.0
    %2037 = vmatpush1.msra.mxu0 0.0
    %2038 = vmatprep.subr.mxu0 0.0
    %2039 = vmatpush1.msra.mxu0 0.0
    %2040 = vmatprep.subr.mxu0 0.0
    %2041 = vmatpush1.msra.mxu0 0.0
    %2042 = vmatprep.subr.mxu0 0.0
    %2043 = vmatpush1.msra.mxu0 0.0
    %2044 = vmatprep.subr.mxu0 0.0
    %2045 = vmatpush1.msra.mxu0 0.0
    %2046 = vmatprep.subr.mxu0 0.0
    %2047 = vmatpush1.msra.mxu0 0.0
    %2048 = vmatprep.subr.mxu0 0.0
    %2049 = vmatpush1.msra.mxu0 0.0
    %2050 = vmatprep.subr.mxu0 0.0
    %2051 = vmatpush1.msra.mxu0 0.0
    %2052 = vmatprep.subr.mxu0 0.0
    %2053 = vmatpush1.msra.mxu0 0.0
    %2054 = vmatprep.subr.mxu0 0.0
    %2055 = vmatpush1.msra.mxu0 0.0
    %2056 = vmatprep.subr.mxu0 0.0
    %2057 = vmatpush1.msra.mxu0 0.0
    %2058 = vmatprep.subr.mxu0 0.0
    %2059 = vmatpush1.msra.mxu0 0.0
    %2060 = vmatprep.mubr.f32.mxu0 0.0
    %2061 = vmatmul.mubr.f32.gmra.mrb[0].mxu0 %v1994
    %v2062 = vpop.f32.mrb[0].mxu0
    %v2063 = vadd.f32 0.0, %v2062
    %v2064 = vpop.f32.mrb[0].mxu0
    %2065 = vdwg.mxu0
    %v2066 = vadd.f32 %v1389, %v2063
    %v2067 = vxor.u32 %v2066, 2147483648
    %v2068 = vmul.f32 %v2067, 1.442695
    %v2069 = vpow.pop %v2068
    %v2070 = vadd.f32 %v2069, 1.0
    %v2071 = vrcp.pop %v2070
    %v2072 = vmul.f32 1.0, %v2071
    %v2073 = vtanh.pop %v2066
    %v2074 = vmul.f32 %v2072, %v1984
    %2076 = vrot.lane.b32.xlu0 %v2073, 64
    %v2077 = vpop.permute.xlu0 %2076
    %v2079 = vmul.f32 %v2072, %v2077
    %2081 = vrot.lane.b32.xlu0 %v2079, 32
    %v2082 = vpop.permute.xlu0 %2081
    %v2084 = vadd.f32 %v2074, %v2082
    %v2085 = vtanh.pop %v2084
    %2087 = vrot.lane.b32.xlu0 %v2085, 64
    %v2088 = vpop.permute.xlu0 %2087
    %v2090 = vmul.f32 %v2072, %v2088
    %2092 = vrot.lane.b32.xlu0 %v2090, 32
    %v2093 = vpop.permute.xlu0 %2092
    %v2094 = vsel %vm337, %v2093, 0
    %2096 = vmatprep.subr.mxu0 0.0
    %2097 = vmatpush1.msra.mxu0 %v1392
    %2098 = vmatprep.subr.mxu0 0.0
    %2099 = vmatpush1.msra.mxu0 %v1393
    %2100 = vmatprep.subr.mxu0 0.0
    %2101 = vmatpush1.msra.mxu0 %v1394
    %2102 = vmatprep.subr.mxu0 0.0
    %2103 = vmatpush1.msra.mxu0 %v1395
    %2104 = vmatprep.subr.mxu0 0.0
    %2105 = vmatpush1.msra.mxu0 0.0
    %2106 = vmatprep.subr.mxu0 0.0
    %2107 = vmatpush1.msra.mxu0 0.0
    %2108 = vmatprep.subr.mxu0 0.0
    %2109 = vmatpush1.msra.mxu0 0.0
    %2110 = vmatprep.subr.mxu0 0.0
    %2111 = vmatpush1.msra.mxu0 0.0
    %2112 = vmatprep.subr.mxu0 0.0
    %2113 = vmatpush1.msra.mxu0 0.0
    %2114 = vmatprep.subr.mxu0 0.0
    %2115 = vmatpush1.msra.mxu0 0.0
    %2116 = vmatprep.subr.mxu0 0.0
    %2117 = vmatpush1.msra.mxu0 0.0
    %2118 = vmatprep.subr.mxu0 0.0
    %2119 = vmatpush1.msra.mxu0 0.0
    %2120 = vmatprep.subr.mxu0 0.0
    %2121 = vmatpush1.msra.mxu0 0.0
    %2122 = vmatprep.subr.mxu0 0.0
    %2123 = vmatpush1.msra.mxu0 0.0
    %2124 = vmatprep.subr.mxu0 0.0
    %2125 = vmatpush1.msra.mxu0 0.0
    %2126 = vmatprep.subr.mxu0 0.0
    %2127 = vmatpush1.msra.mxu0 0.0
    %2128 = vmatprep.subr.mxu0 0.0
    %2129 = vmatpush1.msra.mxu0 0.0
    %2130 = vmatprep.subr.mxu0 0.0
    %2131 = vmatpush1.msra.mxu0 0.0
    %2132 = vmatprep.subr.mxu0 0.0
    %2133 = vmatpush1.msra.mxu0 0.0
    %2134 = vmatprep.subr.mxu0 0.0
    %2135 = vmatpush1.msra.mxu0 0.0
    %2136 = vmatprep.subr.mxu0 0.0
    %2137 = vmatpush1.msra.mxu0 0.0
    %2138 = vmatprep.subr.mxu0 0.0
    %2139 = vmatpush1.msra.mxu0 0.0
    %2140 = vmatprep.subr.mxu0 0.0
    %2141 = vmatpush1.msra.mxu0 0.0
    %2142 = vmatprep.subr.mxu0 0.0
    %2143 = vmatpush1.msra.mxu0 0.0
    %2144 = vmatprep.subr.mxu0 0.0
    %2145 = vmatpush1.msra.mxu0 0.0
    %2146 = vmatprep.subr.mxu0 0.0
    %2147 = vmatpush1.msra.mxu0 0.0
    %2148 = vmatprep.subr.mxu0 0.0
    %2149 = vmatpush1.msra.mxu0 0.0
    %2150 = vmatprep.subr.mxu0 0.0
    %2151 = vmatpush1.msra.mxu0 0.0
    %2152 = vmatprep.subr.mxu0 0.0
    %2153 = vmatpush1.msra.mxu0 0.0
    %2154 = vmatprep.subr.mxu0 0.0
    %2155 = vmatpush1.msra.mxu0 0.0
    %2156 = vmatprep.subr.mxu0 0.0
    %2157 = vmatpush1.msra.mxu0 0.0
    %2158 = vmatprep.subr.mxu0 0.0
    %2159 = vmatpush1.msra.mxu0 0.0
    %2160 = vmatprep.mubr.f32.mxu0 0.0
    %2161 = vmatmul.mubr.f32.gmra.mrb[0].mxu0 %v2094
    %v2162 = vpop.f32.mrb[0].mxu0
    %v2163 = vadd.f32 0.0, %v2162
    %v2164 = vpop.f32.mrb[0].mxu0
    %2165 = vdwg.mxu0
    %v2166 = vadd.f32 %v1389, %v2163
    %v2167 = vxor.u32 %v2166, 2147483648
    %v2168 = vmul.f32 %v2167, 1.442695
    %v2169 = vpow.pop %v2168
    %v2170 = vadd.f32 %v2169, 1.0
    %v2171 = vrcp.pop %v2170
    %v2172 = vmul.f32 1.0, %v2171
    %v2173 = vtanh.pop %v2166
    %v2174 = vmul.f32 %v2172, %v2084
    %2176 = vrot.lane.b32.xlu0 %v2173, 64
    %v2177 = vpop.permute.xlu0 %2176
    %v2179 = vmul.f32 %v2172, %v2177
    %2181 = vrot.lane.b32.xlu0 %v2179, 32
    %v2182 = vpop.permute.xlu0 %2181
    %v2184 = vadd.f32 %v2174, %v2182
    %v2185 = vtanh.pop %v2184
    %2187 = vrot.lane.b32.xlu0 %v2185, 64
    %v2188 = vpop.permute.xlu0 %2187
    %v2190 = vmul.f32 %v2172, %v2188
    %2193 = vrot.lane.b32.xlu0 %v2190, 32
    %v2194 = vpop.permute.xlu0 %2193
    %v2196 = vsel %vm203, %v1493, %v2194
    %v2199 = vsel %vm203, %v1593, %v2093
    %v2202 = vsel %vm203, %v1693, %v1993
    %v2205 = vsel %vm203, %v1793, %v1893
    %v2206 = vsel %vm203, %v1893, %v1793
    %v2207 = vsel %vm203, %v1993, %v1693
    %v2208 = vsel %vm203, %v2093, %v1593
    %v2209 = vsel %vm203, %v2194, %v1493
    %v2210 = vld [vmem:[%s7] sm:$0xff]
    %v2211 = vld [vmem:[%s7 + $0x8] sm:$0xff]
    %v2212 = vld [vmem:[%s7 + $0x10] sm:$0xff]
    %v2213 = vld [vmem:[%s7 + $0x18] sm:$0xff]
    %v2214 = vld [vmem:[%s8 + $0x3] sm:$0x1]
    %v2215 = vlaneseq
    %v2216 = vshrl.u32 %v2215, 7
    %v2217 = vsub.s32 0, %v2216
    %v2218 = vrot.slane %v2214, %v2217
    %v2220 = vsel %vm337, %v2196, 0
    %v2223 = vsel %vm337, %v2199, 0
    %v2226 = vsel %vm337, %v2202, 0
    %v2229 = vsel %vm337, %v2205, 0
    %v2232 = vsel %vm337, %v2206, 0
    %v2235 = vsel %vm337, %v2207, 0
    %v2238 = vsel %vm337, %v2208, 0
    %v2241 = vsel %vm337, %v2209, 0
    %2243 = vmatprep.subr.mxu0 0.0
    %2244 = vmatpush1.msra.mxu0 %v2210
    %2245 = vmatprep.subr.mxu0 0.0
    %2246 = vmatpush1.msra.mxu0 %v2211
    %2247 = vmatprep.subr.mxu0 0.0
    %2248 = vmatpush1.msra.mxu0 %v2212
    %2249 = vmatprep.subr.mxu0 0.0
    %2250 = vmatpush1.msra.mxu0 %v2213
    %2251 = vmatprep.subr.mxu0 0.0
    %2252 = vmatpush1.msra.mxu0 0.0
    %2253 = vmatprep.subr.mxu0 0.0
    %2254 = vmatpush1.msra.mxu0 0.0
    %2255 = vmatprep.subr.mxu0 0.0
    %2256 = vmatpush1.msra.mxu0 0.0
    %2257 = vmatprep.subr.mxu0 0.0
    %2258 = vmatpush1.msra.mxu0 0.0
    %2259 = vmatprep.subr.mxu0 0.0
    %2260 = vmatpush1.msra.mxu0 0.0
    %2261 = vmatprep.subr.mxu0 0.0
    %2262 = vmatpush1.msra.mxu0 0.0
    %2263 = vmatprep.subr.mxu0 0.0
    %2264 = vmatpush1.msra.mxu0 0.0
    %2265 = vmatprep.subr.mxu0 0.0
    %2266 = vmatpush1.msra.mxu0 0.0
    %2267 = vmatprep.subr.mxu0 0.0
    %2268 = vmatpush1.msra.mxu0 0.0
    %2269 = vmatprep.subr.mxu0 0.0
    %2270 = vmatpush1.msra.mxu0 0.0
    %2271 = vmatprep.subr.mxu0 0.0
    %2272 = vmatpush1.msra.mxu0 0.0
    %2273 = vmatprep.subr.mxu0 0.0
    %2274 = vmatpush1.msra.mxu0 0.0
    %2275 = vmatprep.subr.mxu0 0.0
    %2276 = vmatpush1.msra.mxu0 0.0
    %2277 = vmatprep.subr.mxu0 0.0
    %2278 = vmatpush1.msra.mxu0 0.0
    %2279 = vmatprep.subr.mxu0 0.0
    %2280 = vmatpush1.msra.mxu0 0.0
    %2281 = vmatprep.subr.mxu0 0.0
    %2282 = vmatpush1.msra.mxu0 0.0
    %2283 = vmatprep.subr.mxu0 0.0
    %2284 = vmatpush1.msra.mxu0 0.0
    %2285 = vmatprep.subr.mxu0 0.0
    %2286 = vmatpush1.msra.mxu0 0.0
    %2287 = vmatprep.subr.mxu0 0.0
    %2288 = vmatpush1.msra.mxu0 0.0
    %2289 = vmatprep.subr.mxu0 0.0
    %2290 = vmatpush1.msra.mxu0 0.0
    %2291 = vmatprep.subr.mxu0 0.0
    %2292 = vmatpush1.msra.mxu0 0.0
    %2293 = vmatprep.subr.mxu0 0.0
    %2294 = vmatpush1.msra.mxu0 0.0
    %2295 = vmatprep.subr.mxu0 0.0
    %2296 = vmatpush1.msra.mxu0 0.0
    %2297 = vmatprep.subr.mxu0 0.0
    %2298 = vmatpush1.msra.mxu0 0.0
    %2299 = vmatprep.subr.mxu0 0.0
    %2300 = vmatpush1.msra.mxu0 0.0
    %2301 = vmatprep.subr.mxu0 0.0
    %2302 = vmatpush1.msra.mxu0 0.0
    %2303 = vmatprep.subr.mxu0 0.0
    %2304 = vmatpush1.msra.mxu0 0.0
    %2305 = vmatprep.subr.mxu0 0.0
    %2306 = vmatpush1.msra.mxu0 0.0
    %2307 = vmatprep.mubr.f32.mxu0 0.0
    %2308 = vmatmul.mubr.f32.gmra.mrb[0].mxu0 %v2220
    %v2309 = vpop.f32.mrb[0].mxu0
    %v2310 = vadd.f32 %v2218, %v2309
    %v2311 = vpop.f32.mrb[0].mxu0
    %2312 = vmatprep.mubr.f32.mxu0 0.0
    %2313 = vmatmul.mubr.f32.gmra.mrb[0].mxu0 %v2223
    %v2314 = vpop.f32.mrb[0].mxu0
    %v2315 = vadd.f32 %v2218, %v2314
    %v2316 = vpop.f32.mrb[0].mxu0
    %2317 = vmatprep.mubr.f32.mxu0 0.0
    %2318 = vmatmul.mubr.f32.gmra.mrb[0].mxu0 %v2226
    %v2319 = vpop.f32.mrb[0].mxu0
    %v2320 = vadd.f32 %v2218, %v2319
    %v2321 = vpop.f32.mrb[0].mxu0
    %2322 = vmatprep.mubr.f32.mxu0 0.0
    %2323 = vmatmul.mubr.f32.gmra.mrb[0].mxu0 %v2229
    %v2324 = vpop.f32.mrb[0].mxu0
    %v2325 = vadd.f32 %v2218, %v2324
    %v2326 = vpop.f32.mrb[0].mxu0
    %2327 = vmatprep.mubr.f32.mxu0 0.0
    %2328 = vmatmul.mubr.f32.gmra.mrb[0].mxu0 %v2232
    %v2329 = vpop.f32.mrb[0].mxu0
    %v2330 = vadd.f32 %v2218, %v2329
    %v2331 = vpop.f32.mrb[0].mxu0
    %2332 = vmatprep.mubr.f32.mxu0 0.0
    %2333 = vmatmul.mubr.f32.gmra.mrb[0].mxu0 %v2235
    %v2334 = vpop.f32.mrb[0].mxu0
    %v2335 = vadd.f32 %v2218, %v2334
    %v2336 = vpop.f32.mrb[0].mxu0
    %2337 = vmatprep.mubr.f32.mxu0 0.0
    %2338 = vmatmul.mubr.f32.gmra.mrb[0].mxu0 %v2238
    %v2339 = vpop.f32.mrb[0].mxu0
    %v2340 = vadd.f32 %v2218, %v2339
    %v2341 = vpop.f32.mrb[0].mxu0
    %2342 = vmatprep.mubr.f32.mxu0 0.0
    %2343 = vmatmul.mubr.f32.gmra.mrb[0].mxu0 %v2241
    %v2344 = vpop.f32.mrb[0].mxu0
    %v2345 = vadd.f32 %v2218, %v2344
    %v2346 = vpop.f32.mrb[0].mxu0
    %2347 = vdwg.mxu0
    %2348 = vst [vmem:[%s10] sm:$0xff] %v2310
    %2349 = vst [vmem:[%s10 + $0x8] sm:$0xff] %v2315
    %2350 = vst [vmem:[%s10 + $0x10] sm:$0xff] %v2320
    %2351 = vst [vmem:[%s10 + $0x18] sm:$0xff] %v2325
    %2352 = vst [vmem:[%s10 + $0x20] sm:$0xff] %v2330
    %2353 = vst [vmem:[%s10 + $0x28] sm:$0xff] %v2335
    %2354 = vst [vmem:[%s10 + $0x30] sm:$0xff] %v2340
    %2355 = vst [vmem:[%s10 + $0x38] sm:$0xff] %v2345
    // Predicated region
    $region58: #{autoencoder_forward.1} parent=1 // pred_check
      _
    $region59: #{autoencoder_forward.1} parent=1 // pred_check_branch
      %2357 = sbr.rel (0) target = $region61
    $region60: #{autoencoder_forward.1} parent=1 // pred_region
      _
    $region61: #{autoencoder_forward.1} parent=1 // pred_fallthru
      _
    // Predicated region
    $region62: #{autoencoder_forward.1} parent=1 // pred_check
      _
    $region63: #{autoencoder_forward.1} parent=1 // pred_check_branch
      %2359 = sbr.rel (0) target = $region65
    $region64: #{autoencoder_forward.1} parent=1 // pred_region
      _
    $region65: #{autoencoder_forward.1} parent=1 // pred_fallthru
      _
    // Predicated region
    $region66: #{autoencoder_forward.1} parent=1 // pred_check
      _
    $region67: #{autoencoder_forward.1} parent=1 // pred_check_branch
      %2361 = sbr.rel (0) target = $region69
    $region68: #{autoencoder_forward.1} parent=1 // pred_region
      _
    $region69: #{autoencoder_forward.1} parent=1 // pred_fallthru
      _
    // Predicated region
    $region70: #{autoencoder_forward.1} parent=1 // pred_check
      _
    $region71: #{autoencoder_forward.1} parent=1 // pred_check_branch
      %2363 = sbr.rel (0) target = $region73
    $region72: #{autoencoder_forward.1} parent=1 // pred_region
      _
    $region73: #{autoencoder_forward.1} parent=1 // pred_fallthru
      _
    %2364 = vsyncpa [#allocation3], 1
    %2365 = vsyncpa [#allocation5], 1
    %2366 = vsyncpa [#allocation8], 1

</llo_original>
